<compile_context>
chip_gen: v6e
topology: v6e:2x2x1
jax: 0.10.0
libtpu: 0.0.40
codegen_flags: <defaults>
</compile_context>

<pallas_src>
import functools

import jax
import jax.numpy as jnp
from jax.experimental import pallas as pl
from jax.experimental.pallas import tpu as pltpu

_MASK_VALUE = -1e30      # additive bias for missing edges
_EDGE_GUARD = -1e29      # rows whose running max never exceeds this have no in-edges
_NEG_SLOPE = 0.01        # F.leaky_relu default (matches the torch reference)


def _round_up(x, m):
    return ((x + m - 1) // m) * m


def _choose_tile(n, max_tile=512):
    """Whole graph in one tile if small, else max_tile (multiple of 8 and 128)."""
    n8 = _round_up(max(n, 8), 8)
    return min(max_tile, n8)


def _supports_bf16_probs():
    """bf16 VPU/EUP exp path exists on v6e / v7x; fall back to f32 elsewhere."""
    try:
        kind = jax.devices()[0].device_kind.lower()
    except Exception:
        return False
    return any(tag in kind for tag in ("v6", "v7", "7x"))


def _gat_project_kernel(x_ref, wt_ref, asrct_ref, adst_ref,
                        z_ref, ssrct_ref, sdst_ref, *, num_heads, f_out):
    """Fused per-head fc projection + per-node attention-score precompute.

    Emits z augmented with a ones column per head so the attention kernel's
    aggregation matmul also produces the softmax denominator.
    """
    x = x_ref[...]                                                     # (T, F_in) bf16
    z = jnp.dot(x, wt_ref[...], preferred_element_type=jnp.float32)    # (T, H*F_out) f32
    z_bf = z.astype(jnp.bfloat16)

    # Per-node, per-head attention coefficients (replaces tiny 1-lane matmuls
    # inside the attention loop).
    sdst_ref[...] = jnp.dot(z_bf, adst_ref[...],
                            preferred_element_type=jnp.float32)        # (T, H)
    ssrct_ref[...] = jax.lax.dot_general(
        asrct_ref[...], z_bf, (((1,), (1,)), ((), ())),
        preferred_element_type=jnp.float32)                            # (H, T)

    # Augmented z: [z_h | 1] per head -> alpha @ z_aug gives (num | sum(alpha)).
    ones = jnp.ones((z_bf.shape[0], 1), z_bf.dtype)
    parts = []
    for h in range(num_heads):
        parts.append(z_bf[:, h * f_out:(h + 1) * f_out])
        parts.append(ones)
    z_ref[...] = jnp.concatenate(parts, axis=-1)                       # (T, H*(F_out+1))


def _gat_attention_kernel(tbl_ref, cnt_ref, sdst_ref, ssrct_ref, z_ref, adj_ref,
                          out_ref, m_sc, acc_sc, *, num_heads, f_out,
                          apply_elu, use_bf16_probs):
    """Flash-style masked softmax + aggregation over non-empty src blocks."""
    i = pl.program_id(0)
    k = pl.program_id(1)
    fa = f_out + 1

    @pl.when(k == 0)
    def _init():
        m_sc[...] = jnp.full_like(m_sc, _MASK_VALUE)
        acc_sc[...] = jnp.zeros_like(acc_sc)

    # Only non-empty (dst, src) blocks are computed; skipped iterations keep
    # the same block index (no re-DMA) and fall straight through.
    @pl.when(k < cnt_ref[i])
    def _compute():
        adj_f = adj_ref[...].astype(jnp.float32)                 # (TQ, TK) 0/1
        bias = jnp.where(adj_f > 0.5, 0.0, _MASK_VALUE)          # additive mask bias
        z_src = z_ref[...]                                       # (TK, H*(F_out+1)) bf16
        s_dst = sdst_ref[...]                                    # (TQ, H) f32
        s_src = ssrct_ref[...]                                   # (H, TK) f32

        for h in range(num_heads):                               # static unroll; H small
            # e[dst, src] = leaky_relu(z_src.a_src + z_dst.a_dst) + mask_bias
            e = s_dst[:, h:h + 1] + s_src[h:h + 1, :]            # (TQ, TK)
            e = jnp.where(e > 0, e, _NEG_SLOPE * e)
            e = e + bias

            m_prev = m_sc[h]                                     # (TQ, 1)
            m_new = jnp.maximum(m_prev, jnp.max(e, axis=-1, keepdims=True))
            corr = jnp.exp(m_prev - m_new)
            x = e - m_new
            if use_bf16_probs:                                   # bf16 EUP path (v6e/v7x)
                x = x.astype(jnp.bfloat16)
            p = jnp.exp(x)                                       # (TQ, TK)
            # One matmul produces both the numerator and (last column) sum(p).
            agg = jnp.dot(p.astype(z_src.dtype),
                          z_src[:, h * fa:(h + 1) * fa],
                          preferred_element_type=jnp.float32)    # (TQ, F_out+1)
            acc_sc[h] = corr * acc_sc[h] + agg
            m_sc[h] = m_new

    @pl.when(k == pl.num_programs(1) - 1)
    def _finalize():
        outs = []
        for h in range(num_heads):
            acc = acc_sc[h]                                      # (TQ, F_out+1)
            inv_l = pl.reciprocal(jnp.maximum(acc[:, f_out:], 1e-30), approx=True)
            o = acc[:, :f_out] * inv_l                           # (TQ, F_out)
            # Nodes with no incoming edges (incl. padding rows) -> 0 output.
            o = jnp.where(m_sc[h] > _EDGE_GUARD, o, 0.0)
            if apply_elu:
                # Fused F.elu epilogue.
                # TODO(synk): use jnp.expm1 once Mosaic guarantees its lowering.
                o = jnp.where(o > 0, o, jnp.exp(jnp.minimum(o, 0.0)) - 1.0)
            outs.append(o)
        # Single lane-dense store (no masked sub-128-lane column writes).
        out_ref[...] = jnp.concatenate(outs, axis=-1).astype(out_ref.dtype)


def gat_multihead_layer(x, W, a_src, a_dst, adj, tbl, cnt, *, apply_elu, tile,
                        out_dtype, use_bf16_probs):
    """MultiHeadGATLayer with merge='cat'. x: (Np, F_in) bf16 -> (Np, H*F_out)."""
    H, F_out, F_in = W.shape
    Np = x.shape[0]
    HF = H * F_out
    HFa = H * (F_out + 1)
    nq = Np // tile
    nk = Np // tile

    # Tiny weight preprocessing (outside the kernels), bf16 MXU operands.
    w_t = W.reshape(HF, F_in).T.astype(jnp.bfloat16)               # (F_in, HF)
    eye = jnp.eye(H, dtype=jnp.float32)
    a_s = a_src.reshape(H, F_out)
    a_d = a_dst.reshape(H, F_out)
    asrc_t = (eye[:, :, None] * a_s[:, None, :]).reshape(H, HF).astype(jnp.bfloat16)
    adst = (eye[:, :, None] * a_d[:, None, :]).reshape(H, HF).T.astype(jnp.bfloat16)

    proj_kernel = functools.partial(_gat_project_kernel, num_heads=H, f_out=F_out)
    z_aug, s_src_t, s_dst = pl.pallas_call(
        proj_kernel,
        out_shape=(
            jax.ShapeDtypeStruct((Np, HFa), jnp.bfloat16),   # z (+ ones col per head)
            jax.ShapeDtypeStruct((H, Np), jnp.float32),      # s_src per head (transposed)
            jax.ShapeDtypeStruct((Np, H), jnp.float32),      # s_dst per head
        ),
        grid=(nq,),
        in_specs=[
            pl.BlockSpec((tile, F_in), lambda i: (i, 0)),    # x row tile (bf16)
            pl.BlockSpec((F_in, HF), lambda i: (0, 0)),      # fused fc weight
            pl.BlockSpec((H, HF), lambda i: (0, 0)),         # packed a_src
            pl.BlockSpec((HF, H), lambda i: (0, 0)),         # packed a_dst
        ],
        out_specs=(
            pl.BlockSpec((tile, HFa), lambda i: (i, 0)),
            pl.BlockSpec((H, tile), lambda i: (0, i)),
            pl.BlockSpec((tile, H), lambda i: (i, 0)),
        ),
        compiler_params=pltpu.CompilerParams(dimension_semantics=("parallel",)),
    )(x, w_t, asrc_t, adst)

    attn_kernel = functools.partial(
        _gat_attention_kernel, num_heads=H, f_out=F_out,
        apply_elu=apply_elu, use_bf16_probs=use_bf16_probs)
    out = pl.pallas_call(
        attn_kernel,
        out_shape=jax.ShapeDtypeStruct((Np, HF), out_dtype),
        grid_spec=pltpu.PrefetchScalarGridSpec(
            num_scalar_prefetch=2,                                  # tbl, cnt in SMEM
            grid=(nq, nk),
            in_specs=[
                pl.BlockSpec((tile, H), lambda i, k, tbl, cnt: (i, 0)),        # s_dst
                pl.BlockSpec((H, tile), lambda i, k, tbl, cnt: (0, tbl[i, k])),  # s_src
                pl.BlockSpec((tile, HFa), lambda i, k, tbl, cnt: (tbl[i, k], 0)),  # z
                pl.BlockSpec((tile, tile), lambda i, k, tbl, cnt: (i, tbl[i, k])),  # adj int8
            ],
            out_specs=pl.BlockSpec((tile, HF), lambda i, k, tbl, cnt: (i, 0)),
            scratch_shapes=[
                pltpu.VMEM((H, tile, 1), jnp.float32),          # running max m
                pltpu.VMEM((H, tile, F_out + 1), jnp.float32),  # running (num | denom)
            ],
        ),
        compiler_params=pltpu.CompilerParams(
            dimension_semantics=("parallel", "arbitrary")),
    )(tbl, cnt, s_dst, s_src_t, z_aug, adj)
    return out


def gat_forward(h, params, mask, *, max_tile=512):
    """GAT.forward: layer1 -> F.elu -> layer2 (dropout attr unused in torch forward)."""
    N = h.shape[0]
    tile = _choose_tile(N, max_tile)
    Np = _round_up(N, tile)
    nq = Np // tile
    nk = nq
    use_bf16_probs = _supports_bf16_probs()

    x = h
    if Np != N:
        x = jnp.zeros((Np, h.shape[1]), h.dtype).at[:N].set(h)
    x = x.astype(jnp.bfloat16)

    # int8 adjacency mask (1 = edge, 0 = none); padded rows/cols are 0
    # (the kernel's edge guard zeroes their output).
    adj = jnp.zeros((Np, Np), jnp.int8).at[:N, :N].set((mask > 0).astype(jnp.int8))

    # Per-dst-tile schedule of non-empty src blocks (skipped tiles map to the
    # last valid block so their DMA is elided and the body is pl.when-skipped).
    blk_nonempty = jnp.any(adj.reshape(nq, tile, nk, tile) != 0, axis=(1, 3))  # (nq, nk)
    order = jnp.argsort(jnp.where(blk_nonempty, 0, 1).astype(jnp.int32),
                        axis=1).astype(jnp.int32)                              # nonempty first
    cnt = jnp.sum(blk_nonempty, axis=1).astype(jnp.int32)                      # (nq,)
    fill = jnp.take_along_axis(order, jnp.maximum(cnt - 1, 0)[:, None], axis=1)
    kk = jnp.arange(nk, dtype=jnp.int32)
    tbl = jnp.where(kk[None, :] < cnt[:, None], order, fill).astype(jnp.int32)

    x = gat_multihead_layer(x, params["W1"], params["a1_src"], params["a1_dst"],
                            adj, tbl, cnt, apply_elu=True, tile=tile,
                            out_dtype=jnp.bfloat16,          # bf16 inter-layer activations
                            use_bf16_probs=use_bf16_probs)   # ELU fused into epilogue
    x = gat_multihead_layer(x, params["W2"], params["a2_src"], params["a2_dst"],
                            adj, tbl, cnt, apply_elu=False, tile=tile,
                            out_dtype=jnp.float32,
                            use_bf16_probs=use_bf16_probs)
    return x[:N]


def init_params(key, in_dim, hidden_dim, out_dim, num_heads):
    ks = jax.random.split(key, 6)
    scale = 0.1
    params = {
        # layer1: fc (hidden_dim, in_dim); attn_fc (1, 2*hidden_dim) split src/dst
        "W1": scale * jax.random.normal(ks[0], (num_heads, hidden_dim, in_dim), jnp.float32),
        "a1_src": scale * jax.random.normal(ks[1], (num_heads, hidden_dim, 1), jnp.float32),
        "a1_dst": scale * jax.random.normal(ks[2], (num_heads, hidden_dim, 1), jnp.float32),
        # layer2: input dim = hidden_dim * num_heads
        "W2": scale * jax.random.normal(ks[3], (num_heads, out_dim, hidden_dim * num_heads), jnp.float32),
        "a2_src": scale * jax.random.normal(ks[4], (num_heads, out_dim, 1), jnp.float32),
        "a2_dst": scale * jax.random.normal(ks[5], (num_heads, out_dim, 1), jnp.float32),
    }
    return params


def build_ring_graph_mask(n_nodes):
    """Dense adjacency mask[dst, src]: self-loops + ring edges i -> (i+1) % N."""
    mask = jnp.eye(n_nodes, dtype=jnp.float32)
    src = jnp.arange(n_nodes)
    dst = (src + 1) % n_nodes
    mask = mask.at[dst, src].set(1.0)
    return mask


if __name__ == "__main__":
    N = 16            # number of graph nodes
    IN_DIM = 8
    HIDDEN_DIM = 16
    OUT_DIM = 8
    NUM_HEADS = 2
    DROPOUT = 0.1     # stored but unused in torch GAT.forward

    key = jax.random.PRNGKey(0)
    k_h, k_p = jax.random.split(key)
    h = jax.random.normal(k_h, (N, IN_DIM), jnp.float32)
    params = init_params(k_p, IN_DIM, HIDDEN_DIM, OUT_DIM, NUM_HEADS)
    mask = build_ring_graph_mask(N)

    out = jax.jit(gat_forward)(h, params, mask)
    out = jax.block_until_ready(out)
    assert out.shape == (N, OUT_DIM * NUM_HEADS), out.shape
    assert bool(jnp.all(jnp.isfinite(out)))
    print("KERNEL_OK")
</pallas_src>

<mosaic_0001>
module attributes {stable_mosaic.version = 11 : i64} {
  func.func @_gat_project_kernel(%arg0: i32, %arg1: memref<16x8xbf16, #tpu.memory_space<vmem>>, %arg2: memref<8x32xbf16, #tpu.memory_space<vmem>>, %arg3: memref<2x32xbf16, #tpu.memory_space<vmem>>, %arg4: memref<32x2xbf16, #tpu.memory_space<vmem>>, %arg5: memref<16x34xbf16, #tpu.memory_space<vmem>>, %arg6: memref<2x16xf32, #tpu.memory_space<vmem>>, %arg7: memref<16x2xf32, #tpu.memory_space<vmem>>) attributes {dimension_semantics = [#tpu.dimension_semantics<parallel>], iteration_bounds = array<i64: 1>, scalar_prefetch = 0 : i64, scratch_operands = 0 : i64, tpu.core_type = #tpu.core_type<tc>, window_params = [{transform_indices = @transform_0, window_bounds = array<i64: 16, 8>}, {pipeline_mode = #tpu.pipeline_mode<synchronous>, transform_indices = @transform_1, window_bounds = array<i64: 8, 32>}, {pipeline_mode = #tpu.pipeline_mode<synchronous>, transform_indices = @transform_2, window_bounds = array<i64: 2, 32>}, {pipeline_mode = #tpu.pipeline_mode<synchronous>, transform_indices = @transform_3, window_bounds = array<i64: 32, 2>}, {transform_indices = @transform_4, window_bounds = array<i64: 16, 34>}, {transform_indices = @transform_5, window_bounds = array<i64: 2, 16>}, {transform_indices = @transform_6, window_bounds = array<i64: 16, 2>}]} {
    %c0 = arith.constant 0 : index
    %c0_0 = arith.constant 0 : index
    %0 = vector.load %arg1[%c0, %c0_0] : memref<16x8xbf16, #tpu.memory_space<vmem>>, vector<16x8xbf16>
    %c0_1 = arith.constant 0 : index
    %c0_2 = arith.constant 0 : index
    %1 = vector.load %arg2[%c0_1, %c0_2] : memref<8x32xbf16, #tpu.memory_space<vmem>>, vector<8x32xbf16>
    %cst = arith.constant dense<0.000000e+00> : vector<16x32xf32>
    %2 = tpu.matmul %0, %1, %cst {dimension_numbers = #tpu.dot_dimension_numbers<[1], [0], [0], [1], [0, 0, 1, 1], [], []>} : vector<16x8xbf16>, vector<8x32xbf16>, vector<16x32xf32> -> vector<16x32xf32>
    %3 = arith.truncf %2 : vector<16x32xf32> to vector<16x32xbf16>
    %c0_3 = arith.constant 0 : index
    %c0_4 = arith.constant 0 : index
    %4 = vector.load %arg4[%c0_3, %c0_4] : memref<32x2xbf16, #tpu.memory_space<vmem>>, vector<32x2xbf16>
    %cst_5 = arith.constant dense<0.000000e+00> : vector<16x2xf32>
    %5 = tpu.matmul %3, %4, %cst_5 {dimension_numbers = #tpu.dot_dimension_numbers<[1], [0], [0], [1], [0, 0, 1, 1], [], []>} : vector<16x32xbf16>, vector<32x2xbf16>, vector<16x2xf32> -> vector<16x2xf32>
    %c0_6 = arith.constant 0 : index
    %c0_7 = arith.constant 0 : index
    %6 = vector.load %arg7[%c0_6, %c0_7] : memref<16x2xf32, #tpu.memory_space<vmem>>, vector<16x2xf32>
    tpu.vector_store %arg7[%c0_6, %c0_7], %5 {strides = array<i32>} : memref<16x2xf32, #tpu.memory_space<vmem>>, vector<16x2xf32>,
    %c0_8 = arith.constant 0 : index
    %c0_9 = arith.constant 0 : index
    %7 = vector.load %arg3[%c0_8, %c0_9] : memref<2x32xbf16, #tpu.memory_space<vmem>>, vector<2x32xbf16>
    %cst_10 = arith.constant dense<0.000000e+00> : vector<2x16xf32>
    %8 = tpu.matmul %7, %3, %cst_10 {dimension_numbers = #tpu.dot_dimension_numbers<[1], [1], [0], [0], [0, 0, 1, 0], [], []>} : vector<2x32xbf16>, vector<16x32xbf16>, vector<2x16xf32> -> vector<2x16xf32>
    %c0_11 = arith.constant 0 : index
    %c0_12 = arith.constant 0 : index
    %9 = vector.load %arg6[%c0_11, %c0_12] : memref<2x16xf32, #tpu.memory_space<vmem>>, vector<2x16xf32>
    tpu.vector_store %arg6[%c0_11, %c0_12], %8 {strides = array<i32>} : memref<2x16xf32, #tpu.memory_space<vmem>>, vector<2x16xf32>,
    %cst_13 = arith.constant 1.000000e+00 : bf16
    %10 = vector.broadcast %cst_13 : bf16 to vector<16x1xbf16>
    %11 = vector.extract_strided_slice %3 {offsets = [0, 0], sizes = [16, 16], strides = [1, 1]} : vector<16x32xbf16> to vector<16x16xbf16>
    %12 = vector.extract_strided_slice %3 {offsets = [0, 16], sizes = [16, 16], strides = [1, 1]} : vector<16x32xbf16> to vector<16x16xbf16>
    %13 = tpu.concatenate %11, %10, %12, %10 in 1 : vector<16x16xbf16>, vector<16x1xbf16>, vector<16x16xbf16>, vector<16x1xbf16> -> vector<16x34xbf16>
    %c0_14 = arith.constant 0 : index
    %c0_15 = arith.constant 0 : index
    %14 = vector.load %arg5[%c0_14, %c0_15] : memref<16x34xbf16, #tpu.memory_space<vmem>>, vector<16x34xbf16>
    tpu.vector_store %arg5[%c0_14, %c0_15], %13 {strides = array<i32>} : memref<16x34xbf16, #tpu.memory_space<vmem>>, vector<16x34xbf16>,
    return
  }
  func.func @transform_0(%arg0: i32) -> (i32, i32) {
    %c0_i32 = arith.constant 0 : i32
    %c0_i32_0 = arith.constant 0 : i32
    return %arg0, %c0_i32 : i32, i32
  }
  func.func @transform_1(%arg0: i32) -> (i32, i32) {
    %c0_i32 = arith.constant 0 : i32
    %c0_i32_0 = arith.constant 0 : i32
    %c0_i32_1 = arith.constant 0 : i32
    return %c0_i32, %c0_i32_0 : i32, i32
  }
  func.func @transform_2(%arg0: i32) -> (i32, i32) {
    %c0_i32 = arith.constant 0 : i32
    %c0_i32_0 = arith.constant 0 : i32
    %c0_i32_1 = arith.constant 0 : i32
    return %c0_i32, %c0_i32_0 : i32, i32
  }
  func.func @transform_3(%arg0: i32) -> (i32, i32) {
    %c0_i32 = arith.constant 0 : i32
    %c0_i32_0 = arith.constant 0 : i32
    %c0_i32_1 = arith.constant 0 : i32
    return %c0_i32, %c0_i32_0 : i32, i32
  }
  func.func @transform_4(%arg0: i32) -> (i32, i32) {
    %c0_i32 = arith.constant 0 : i32
    %c0_i32_0 = arith.constant 0 : i32
    return %arg0, %c0_i32 : i32, i32
  }
  func.func @transform_5(%arg0: i32) -> (i32, i32) {
    %c0_i32 = arith.constant 0 : i32
    %c0_i32_0 = arith.constant 0 : i32
    return %c0_i32, %arg0 : i32, i32
  }
  func.func @transform_6(%arg0: i32) -> (i32, i32) {
    %c0_i32 = arith.constant 0 : i32
    %c0_i32_0 = arith.constant 0 : i32
    return %arg0, %c0_i32 : i32, i32
  }
}

module attributes {stable_mosaic.version = 11 : i64} {
  func.func @_gat_attention_kernel(%arg0: i32, %arg1: i32, %arg2: memref<1x1xi32, #tpu.memory_space<smem>>, %arg3: memref<1xi32, #tpu.memory_space<smem>>, %arg4: memref<16x2xf32, #tpu.memory_space<vmem>>, %arg5: memref<2x16xf32, #tpu.memory_space<vmem>>, %arg6: memref<16x34xbf16, #tpu.memory_space<vmem>>, %arg7: memref<16x16xi8, #tpu.memory_space<vmem>>, %arg8: memref<16x32xbf16, #tpu.memory_space<vmem>>, %arg9: memref<2x16x1xf32, #tpu.memory_space<vmem>>, %arg10: memref<2x16x17xf32, #tpu.memory_space<vmem>>) attributes {dimension_semantics = [#tpu.dimension_semantics<parallel>, #tpu.dimension_semantics<arbitrary>], iteration_bounds = array<i64: 1, 1>, scalar_prefetch = 2 : i64, scratch_operands = 2 : i64, tpu.core_type = #tpu.core_type<tc>, window_params = [{transform_indices = @transform_0, window_bounds = array<i64: 16, 2>}, {transform_indices = @transform_1, window_bounds = array<i64: 2, 16>}, {transform_indices = @transform_2, window_bounds = array<i64: 16, 34>}, {transform_indices = @transform_3, window_bounds = array<i64: 16, 16>}, {transform_indices = @transform_4, window_bounds = array<i64: 16, 32>}]} {
    %c0_i32 = arith.constant 0 : i32
    %0 = arith.cmpi eq, %arg1, %c0_i32 : i32
    %1 = arith.extui %0 : i1 to i32
    %c0_i32_0 = arith.constant 0 : i32
    %2 = arith.cmpi ne, %1, %c0_i32_0 : i32
    scf.if %2 {
      %cst = arith.constant -1.000000e+30 : f32
      %11 = vector.broadcast %cst : f32 to vector<2x16x1xf32>
      %c0 = arith.constant 0 : index
      %c0_4 = arith.constant 0 : index
      %c0_5 = arith.constant 0 : index
      %12 = vector.load %arg9[%c0, %c0_4, %c0_5] : memref<2x16x1xf32, #tpu.memory_space<vmem>>, vector<2x16x1xf32>
      tpu.vector_store %arg9[%c0, %c0_4, %c0_5], %11 {strides = array<i32>} : memref<2x16x1xf32, #tpu.memory_space<vmem>>, vector<2x16x1xf32>,
      %cst_6 = arith.constant 0.000000e+00 : f32
      %13 = vector.broadcast %cst_6 : f32 to vector<2x16x17xf32>
      %c0_7 = arith.constant 0 : index
      %c0_8 = arith.constant 0 : index
      %c0_9 = arith.constant 0 : index
      %14 = vector.load %arg10[%c0_7, %c0_8, %c0_9] : memref<2x16x17xf32, #tpu.memory_space<vmem>>, vector<2x16x17xf32>
      tpu.vector_store %arg10[%c0_7, %c0_8, %c0_9], %13 {strides = array<i32>} : memref<2x16x17xf32, #tpu.memory_space<vmem>>, vector<2x16x17xf32>,
    } else {
    }
    %3 = arith.index_cast %arg0 : i32 to index
    %4 = memref.load %arg3[%3] : memref<1xi32, #tpu.memory_space<smem>>
    %5 = arith.cmpi slt, %arg1, %4 : i32
    %6 = arith.extui %5 : i1 to i32
    %c0_i32_1 = arith.constant 0 : i32
    %7 = arith.cmpi ne, %6, %c0_i32_1 : i32
    scf.if %7 {
      %c0 = arith.constant 0 : index
      %c0_4 = arith.constant 0 : index
      %11 = vector.load %arg7[%c0, %c0_4] : memref<16x16xi8, #tpu.memory_space<vmem>>, vector<16x16xi8>
      %12 = arith.sitofp %11 : vector<16x16xi8> to vector<16x16xf32>
      %cst = arith.constant 5.000000e-01 : f32
      %13 = vector.broadcast %cst : f32 to vector<16x16xf32>
      %14 = arith.cmpf ogt, %12, %13 : vector<16x16xf32>
      %cst_5 = arith.constant 0.000000e+00 : f32
      %cst_6 = arith.constant -1.000000e+30 : f32
      %15 = vector.broadcast %cst_5 : f32 to vector<16x16xf32>
      %16 = vector.broadcast %cst_6 : f32 to vector<16x16xf32>
      %17 = arith.select %14, %15, %16 : vector<16x16xi1>, vector<16x16xf32>
      %c0_7 = arith.constant 0 : index
      %c0_8 = arith.constant 0 : index
      %18 = vector.load %arg6[%c0_7, %c0_8] : memref<16x34xbf16, #tpu.memory_space<vmem>>, vector<16x34xbf16>
      %c0_9 = arith.constant 0 : index
      %c0_10 = arith.constant 0 : index
      %19 = vector.load %arg4[%c0_9, %c0_10] : memref<16x2xf32, #tpu.memory_space<vmem>>, vector<16x2xf32>
      %c0_11 = arith.constant 0 : index
      %c0_12 = arith.constant 0 : index
      %20 = vector.load %arg5[%c0_11, %c0_12] : memref<2x16xf32, #tpu.memory_space<vmem>>, vector<2x16xf32>
      %21 = vector.extract_strided_slice %19 {offsets = [0, 0], sizes = [16, 1], strides = [1, 1]} : vector<16x2xf32> to vector<16x1xf32>
      %22 = vector.extract_strided_slice %20 {offsets = [0, 0], sizes = [1, 16], strides = [1, 1]} : vector<2x16xf32> to vector<1x16xf32>
      %23 = vector.broadcast %21 : vector<16x1xf32> to vector<16x16xf32>
      %24 = vector.broadcast %22 : vector<1x16xf32> to vector<16x16xf32>
      %25 = arith.addf %23, %24 : vector<16x16xf32>
      %cst_13 = arith.constant 0.000000e+00 : f32
      %26 = vector.broadcast %cst_13 : f32 to vector<16x16xf32>
      %27 = arith.cmpf ogt, %25, %26 : vector<16x16xf32>
      %cst_14 = arith.constant 0.00999999977 : f32
      %28 = vector.broadcast %cst_14 : f32 to vector<16x16xf32>
      %29 = arith.mulf %28, %25 : vector<16x16xf32>
      %30 = arith.select %27, %25, %29 : vector<16x16xi1>, vector<16x16xf32>
      %31 = arith.addf %30, %17 : vector<16x16xf32>
      %c0_15 = arith.constant 0 : index
      %c0_16 = arith.constant 0 : index
      %c0_17 = arith.constant 0 : index
      %32 = vector.load %arg9[%c0_15, %c0_16, %c0_17] : memref<2x16x1xf32, #tpu.memory_space<vmem>>, vector<1x16x1xf32>
      %33 = vector.shape_cast %32 : vector<1x16x1xf32> to vector<16x1xf32>
      %cst_18 = arith.constant dense<0xFF800000> : vector<16xf32>
      %34 = vector.multi_reduction <maximumf>, %31, %cst_18 [1] : vector<16x16xf32> to vector<16xf32>
      %35 = vector.shape_cast %34 : vector<16xf32> to vector<16x1xf32>
      %36 = arith.maximumf %33, %35 : vector<16x1xf32>
      %37 = arith.subf %33, %36 : vector<16x1xf32>
      %38 = math.exp %37 : vector<16x1xf32>
      %39 = vector.broadcast %36 : vector<16x1xf32> to vector<16x16xf32>
      %40 = arith.subf %31, %39 : vector<16x16xf32>
      %41 = math.exp %40 : vector<16x16xf32>
      %42 = arith.truncf %41 : vector<16x16xf32> to vector<16x16xbf16>
      %43 = vector.extract_strided_slice %18 {offsets = [0, 0], sizes = [16, 17], strides = [1, 1]} : vector<16x34xbf16> to vector<16x17xbf16>
      %cst_19 = arith.constant dense<0.000000e+00> : vector<16x17xf32>
      %44 = tpu.matmul %42, %43, %cst_19 {dimension_numbers = #tpu.dot_dimension_numbers<[1], [0], [0], [1], [0, 0, 1, 1], [], []>} : vector<16x16xbf16>, vector<16x17xbf16>, vector<16x17xf32> -> vector<16x17xf32>
      %c0_20 = arith.constant 0 : index
      %c0_21 = arith.constant 0 : index
      %c0_22 = arith.constant 0 : index
      %45 = vector.load %arg10[%c0_20, %c0_21, %c0_22] : memref<2x16x17xf32, #tpu.memory_space<vmem>>, vector<1x16x17xf32>
      %46 = vector.shape_cast %45 : vector<1x16x17xf32> to vector<16x17xf32>
      %47 = vector.broadcast %38 : vector<16x1xf32> to vector<16x17xf32>
      %48 = arith.mulf %47, %46 : vector<16x17xf32>
      %49 = arith.addf %48, %44 : vector<16x17xf32>
      %c0_23 = arith.constant 0 : index
      %c0_24 = arith.constant 0 : index
      %c0_25 = arith.constant 0 : index
      %50 = vector.load %arg10[%c0_23, %c0_24, %c0_25] : memref<2x16x17xf32, #tpu.memory_space<vmem>>, vector<1x16x17xf32>
      %51 = vector.shape_cast %50 : vector<1x16x17xf32> to vector<16x17xf32>
      %52 = vector.shape_cast %49 : vector<16x17xf32> to vector<1x16x17xf32>
      tpu.vector_store %arg10[%c0_23, %c0_24, %c0_25], %52 {strides = array<i32>} : memref<2x16x17xf32, #tpu.memory_space<vmem>>, vector<1x16x17xf32>,
      %c0_26 = arith.constant 0 : index
      %c0_27 = arith.constant 0 : index
      %c0_28 = arith.constant 0 : index
      %53 = vector.load %arg9[%c0_26, %c0_27, %c0_28] : memref<2x16x1xf32, #tpu.memory_space<vmem>>, vector<1x16x1xf32>
      %54 = vector.shape_cast %53 : vector<1x16x1xf32> to vector<16x1xf32>
      %55 = vector.shape_cast %36 : vector<16x1xf32> to vector<1x16x1xf32>
      tpu.vector_store %arg9[%c0_26, %c0_27, %c0_28], %55 {strides = array<i32>} : memref<2x16x1xf32, #tpu.memory_space<vmem>>, vector<1x16x1xf32>,
      %56 = vector.extract_strided_slice %19 {offsets = [0, 1], sizes = [16, 1], strides = [1, 1]} : vector<16x2xf32> to vector<16x1xf32>
      %57 = vector.extract_strided_slice %20 {offsets = [1, 0], sizes = [1, 16], strides = [1, 1]} : vector<2x16xf32> to vector<1x16xf32>
      %58 = vector.broadcast %56 : vector<16x1xf32> to vector<16x16xf32>
      %59 = vector.broadcast %57 : vector<1x16xf32> to vector<16x16xf32>
      %60 = arith.addf %58, %59 : vector<16x16xf32>
      %cst_29 = arith.constant 0.000000e+00 : f32
      %61 = vector.broadcast %cst_29 : f32 to vector<16x16xf32>
      %62 = arith.cmpf ogt, %60, %61 : vector<16x16xf32>
      %cst_30 = arith.constant 0.00999999977 : f32
      %63 = vector.broadcast %cst_30 : f32 to vector<16x16xf32>
      %64 = arith.mulf %63, %60 : vector<16x16xf32>
      %65 = arith.select %62, %60, %64 : vector<16x16xi1>, vector<16x16xf32>
      %66 = arith.addf %65, %17 : vector<16x16xf32>
      %c1 = arith.constant 1 : index
      %c0_31 = arith.constant 0 : index
      %c0_32 = arith.constant 0 : index
      %67 = vector.load %arg9[%c1, %c0_31, %c0_32] : memref<2x16x1xf32, #tpu.memory_space<vmem>>, vector<1x16x1xf32>
      %68 = vector.shape_cast %67 : vector<1x16x1xf32> to vector<16x1xf32>
      %cst_33 = arith.constant dense<0xFF800000> : vector<16xf32>
      %69 = vector.multi_reduction <maximumf>, %66, %cst_33 [1] : vector<16x16xf32> to vector<16xf32>
      %70 = vector.shape_cast %69 : vector<16xf32> to vector<16x1xf32>
      %71 = arith.maximumf %68, %70 : vector<16x1xf32>
      %72 = arith.subf %68, %71 : vector<16x1xf32>
      %73 = math.exp %72 : vector<16x1xf32>
      %74 = vector.broadcast %71 : vector<16x1xf32> to vector<16x16xf32>
      %75 = arith.subf %66, %74 : vector<16x16xf32>
      %76 = math.exp %75 : vector<16x16xf32>
      %77 = arith.truncf %76 : vector<16x16xf32> to vector<16x16xbf16>
      %78 = vector.extract_strided_slice %18 {offsets = [0, 17], sizes = [16, 17], strides = [1, 1]} : vector<16x34xbf16> to vector<16x17xbf16>
      %cst_34 = arith.constant dense<0.000000e+00> : vector<16x17xf32>
      %79 = tpu.matmul %77, %78, %cst_34 {dimension_numbers = #tpu.dot_dimension_numbers<[1], [0], [0], [1], [0, 0, 1, 1], [], []>} : vector<16x16xbf16>, vector<16x17xbf16>, vector<16x17xf32> -> vector<16x17xf32>
      %c1_35 = arith.constant 1 : index
      %c0_36 = arith.constant 0 : index
      %c0_37 = arith.constant 0 : index
      %80 = vector.load %arg10[%c1_35, %c0_36, %c0_37] : memref<2x16x17xf32, #tpu.memory_space<vmem>>, vector<1x16x17xf32>
      %81 = vector.shape_cast %80 : vector<1x16x17xf32> to vector<16x17xf32>
      %82 = vector.broadcast %73 : vector<16x1xf32> to vector<16x17xf32>
      %83 = arith.mulf %82, %81 : vector<16x17xf32>
      %84 = arith.addf %83, %79 : vector<16x17xf32>
      %c1_38 = arith.constant 1 : index
      %c0_39 = arith.constant 0 : index
      %c0_40 = arith.constant 0 : index
      %85 = vector.load %arg10[%c1_38, %c0_39, %c0_40] : memref<2x16x17xf32, #tpu.memory_space<vmem>>, vector<1x16x17xf32>
      %86 = vector.shape_cast %85 : vector<1x16x17xf32> to vector<16x17xf32>
      %87 = vector.shape_cast %84 : vector<16x17xf32> to vector<1x16x17xf32>
      tpu.vector_store %arg10[%c1_38, %c0_39, %c0_40], %87 {strides = array<i32>} : memref<2x16x17xf32, #tpu.memory_space<vmem>>, vector<1x16x17xf32>,
      %c1_41 = arith.constant 1 : index
      %c0_42 = arith.constant 0 : index
      %c0_43 = arith.constant 0 : index
      %88 = vector.load %arg9[%c1_41, %c0_42, %c0_43] : memref<2x16x1xf32, #tpu.memory_space<vmem>>, vector<1x16x1xf32>
      %89 = vector.shape_cast %88 : vector<1x16x1xf32> to vector<16x1xf32>
      %90 = vector.shape_cast %71 : vector<16x1xf32> to vector<1x16x1xf32>
      tpu.vector_store %arg9[%c1_41, %c0_42, %c0_43], %90 {strides = array<i32>} : memref<2x16x1xf32, #tpu.memory_space<vmem>>, vector<1x16x1xf32>,
    } else {
    }
    %c0_i32_2 = arith.constant 0 : i32
    %8 = arith.cmpi eq, %arg1, %c0_i32_2 : i32
    %9 = arith.extui %8 : i1 to i32
    %c0_i32_3 = arith.constant 0 : i32
    %10 = arith.cmpi ne, %9, %c0_i32_3 : i32
    scf.if %10 {
      %c0 = arith.constant 0 : index
      %c0_4 = arith.constant 0 : index
      %c0_5 = arith.constant 0 : index
      %11 = vector.load %arg10[%c0, %c0_4, %c0_5] : memref<2x16x17xf32, #tpu.memory_space<vmem>>, vector<1x16x17xf32>
      %12 = vector.shape_cast %11 : vector<1x16x17xf32> to vector<16x17xf32>
      %13 = vector.extract_strided_slice %12 {offsets = [0, 16], sizes = [16, 1], strides = [1, 1]} : vector<16x17xf32> to vector<16x1xf32>
      %cst = arith.constant 1.000000e-30 : f32
      %14 = vector.broadcast %cst : f32 to vector<16x1xf32>
      %15 = arith.maximumf %13, %14 : vector<16x1xf32>
      %16 = tpu.reciprocal %15 {approx = true} : vector<16x1xf32> -> vector<16x1xf32>
      %17 = vector.extract_strided_slice %12 {offsets = [0, 0], sizes = [16, 16], strides = [1, 1]} : vector<16x17xf32> to vector<16x16xf32>
      %18 = vector.broadcast %16 : vector<16x1xf32> to vector<16x16xf32>
      %19 = arith.mulf %17, %18 : vector<16x16xf32>
      %c0_6 = arith.constant 0 : index
      %c0_7 = arith.constant 0 : index
      %c0_8 = arith.constant 0 : index
      %20 = vector.load %arg9[%c0_6, %c0_7, %c0_8] : memref<2x16x1xf32, #tpu.memory_space<vmem>>, vector<1x16x1xf32>
      %21 = vector.shape_cast %20 : vector<1x16x1xf32> to vector<16x1xf32>
      %cst_9 = arith.constant -1.000000e+29 : f32
      %22 = vector.broadcast %cst_9 : f32 to vector<16x1xf32>
      %23 = arith.cmpf ogt, %21, %22 : vector<16x1xf32>
      %cst_10 = arith.constant 0.000000e+00 : f32
      %24 = vector.shape_cast %23 : vector<16x1xi1> to vector<16x1xi1>
      %25 = vector.broadcast %24 : vector<16x1xi1> to vector<16x16xi1>
      %26 = vector.broadcast %cst_10 : f32 to vector<16x16xf32>
      %27 = arith.select %25, %19, %26 : vector<16x16xi1>, vector<16x16xf32>
      %cst_11 = arith.constant 0.000000e+00 : f32
      %28 = vector.broadcast %cst_11 : f32 to vector<16x16xf32>
      %29 = arith.cmpf ogt, %27, %28 : vector<16x16xf32>
      %cst_12 = arith.constant 0.000000e+00 : f32
      %30 = vector.broadcast %cst_12 : f32 to vector<16x16xf32>
      %31 = arith.minimumf %27, %30 : vector<16x16xf32>
      %32 = math.exp %31 : vector<16x16xf32>
      %cst_13 = arith.constant 1.000000e+00 : f32
      %33 = vector.broadcast %cst_13 : f32 to vector<16x16xf32>
      %34 = arith.subf %32, %33 : vector<16x16xf32>
      %35 = arith.select %29, %27, %34 : vector<16x16xi1>, vector<16x16xf32>
      %c1 = arith.constant 1 : index
      %c0_14 = arith.constant 0 : index
      %c0_15 = arith.constant 0 : index
      %36 = vector.load %arg10[%c1, %c0_14, %c0_15] : memref<2x16x17xf32, #tpu.memory_space<vmem>>, vector<1x16x17xf32>
      %37 = vector.shape_cast %36 : vector<1x16x17xf32> to vector<16x17xf32>
      %38 = vector.extract_strided_slice %37 {offsets = [0, 16], sizes = [16, 1], strides = [1, 1]} : vector<16x17xf32> to vector<16x1xf32>
      %cst_16 = arith.constant 1.000000e-30 : f32
      %39 = vector.broadcast %cst_16 : f32 to vector<16x1xf32>
      %40 = arith.maximumf %38, %39 : vector<16x1xf32>
      %41 = tpu.reciprocal %40 {approx = true} : vector<16x1xf32> -> vector<16x1xf32>
      %42 = vector.extract_strided_slice %37 {offsets = [0, 0], sizes = [16, 16], strides = [1, 1]} : vector<16x17xf32> to vector<16x16xf32>
      %43 = vector.broadcast %41 : vector<16x1xf32> to vector<16x16xf32>
      %44 = arith.mulf %42, %43 : vector<16x16xf32>
      %c1_17 = arith.constant 1 : index
      %c0_18 = arith.constant 0 : index
      %c0_19 = arith.constant 0 : index
      %45 = vector.load %arg9[%c1_17, %c0_18, %c0_19] : memref<2x16x1xf32, #tpu.memory_space<vmem>>, vector<1x16x1xf32>
      %46 = vector.shape_cast %45 : vector<1x16x1xf32> to vector<16x1xf32>
      %cst_20 = arith.constant -1.000000e+29 : f32
      %47 = vector.broadcast %cst_20 : f32 to vector<16x1xf32>
      %48 = arith.cmpf ogt, %46, %47 : vector<16x1xf32>
      %cst_21 = arith.constant 0.000000e+00 : f32
      %49 = vector.shape_cast %48 : vector<16x1xi1> to vector<16x1xi1>
      %50 = vector.broadcast %49 : vector<16x1xi1> to vector<16x16xi1>
      %51 = vector.broadcast %cst_21 : f32 to vector<16x16xf32>
      %52 = arith.select %50, %44, %51 : vector<16x16xi1>, vector<16x16xf32>
      %cst_22 = arith.constant 0.000000e+00 : f32
      %53 = vector.broadcast %cst_22 : f32 to vector<16x16xf32>
      %54 = arith.cmpf ogt, %52, %53 : vector<16x16xf32>
      %cst_23 = arith.constant 0.000000e+00 : f32
      %55 = vector.broadcast %cst_23 : f32 to vector<16x16xf32>
      %56 = arith.minimumf %52, %55 : vector<16x16xf32>
      %57 = math.exp %56 : vector<16x16xf32>
      %cst_24 = arith.constant 1.000000e+00 : f32
      %58 = vector.broadcast %cst_24 : f32 to vector<16x16xf32>
      %59 = arith.subf %57, %58 : vector<16x16xf32>
      %60 = arith.select %54, %52, %59 : vector<16x16xi1>, vector<16x16xf32>
      %61 = tpu.concatenate %35, %60 in 1 : vector<16x16xf32>, vector<16x16xf32> -> vector<16x32xf32>
      %62 = arith.truncf %61 : vector<16x32xf32> to vector<16x32xbf16>
      %c0_25 = arith.constant 0 : index
      %c0_26 = arith.constant 0 : index
      %63 = vector.load %arg8[%c0_25, %c0_26] : memref<16x32xbf16, #tpu.memory_space<vmem>>, vector<16x32xbf16>
      tpu.vector_store %arg8[%c0_25, %c0_26], %62 {strides = array<i32>} : memref<16x32xbf16, #tpu.memory_space<vmem>>, vector<16x32xbf16>,
    } else {
    }
    return
  }
  func.func @transform_0(%arg0: i32, %arg1: i32, %arg2: memref<1x1xi32, #tpu.memory_space<smem>>, %arg3: memref<1xi32, #tpu.memory_space<smem>>) -> (i32, i32) {
    %c0_i32 = arith.constant 0 : i32
    %c0_i32_0 = arith.constant 0 : i32
    return %arg0, %c0_i32 : i32, i32
  }
  func.func @transform_1(%arg0: i32, %arg1: i32, %arg2: memref<1x1xi32, #tpu.memory_space<smem>>, %arg3: memref<1xi32, #tpu.memory_space<smem>>) -> (i32, i32) {
    %0 = arith.index_cast %arg0 : i32 to index
    %1 = arith.index_cast %arg1 : i32 to index
    %2 = memref.load %arg2[%0, %1] : memref<1x1xi32, #tpu.memory_space<smem>>
    %c0_i32 = arith.constant 0 : i32
    %c0_i32_0 = arith.constant 0 : i32
    return %c0_i32, %2 : i32, i32
  }
  func.func @transform_2(%arg0: i32, %arg1: i32, %arg2: memref<1x1xi32, #tpu.memory_space<smem>>, %arg3: memref<1xi32, #tpu.memory_space<smem>>) -> (i32, i32) {
    %0 = arith.index_cast %arg0 : i32 to index
    %1 = arith.index_cast %arg1 : i32 to index
    %2 = memref.load %arg2[%0, %1] : memref<1x1xi32, #tpu.memory_space<smem>>
    %c0_i32 = arith.constant 0 : i32
    %c0_i32_0 = arith.constant 0 : i32
    return %2, %c0_i32 : i32, i32
  }
  func.func @transform_3(%arg0: i32, %arg1: i32, %arg2: memref<1x1xi32, #tpu.memory_space<smem>>, %arg3: memref<1xi32, #tpu.memory_space<smem>>) -> (i32, i32) {
    %0 = arith.index_cast %arg0 : i32 to index
    %1 = arith.index_cast %arg1 : i32 to index
    %2 = memref.load %arg2[%0, %1] : memref<1x1xi32, #tpu.memory_space<smem>>
    %c0_i32 = arith.constant 0 : i32
    return %arg0, %2 : i32, i32
  }
  func.func @transform_4(%arg0: i32, %arg1: i32, %arg2: memref<1x1xi32, #tpu.memory_space<smem>>, %arg3: memref<1xi32, #tpu.memory_space<smem>>) -> (i32, i32) {
    %c0_i32 = arith.constant 0 : i32
    %c0_i32_0 = arith.constant 0 : i32
    return %arg0, %c0_i32 : i32, i32
  }
}

module attributes {stable_mosaic.version = 11 : i64} {
  func.func @_gat_project_kernel(%arg0: i32, %arg1: memref<16x32xbf16, #tpu.memory_space<vmem>>, %arg2: memref<32x16xbf16, #tpu.memory_space<vmem>>, %arg3: memref<2x16xbf16, #tpu.memory_space<vmem>>, %arg4: memref<16x2xbf16, #tpu.memory_space<vmem>>, %arg5: memref<16x18xbf16, #tpu.memory_space<vmem>>, %arg6: memref<2x16xf32, #tpu.memory_space<vmem>>, %arg7: memref<16x2xf32, #tpu.memory_space<vmem>>) attributes {dimension_semantics = [#tpu.dimension_semantics<parallel>], iteration_bounds = array<i64: 1>, scalar_prefetch = 0 : i64, scratch_operands = 0 : i64, tpu.core_type = #tpu.core_type<tc>, window_params = [{transform_indices = @transform_0, window_bounds = array<i64: 16, 32>}, {pipeline_mode = #tpu.pipeline_mode<synchronous>, transform_indices = @transform_1, window_bounds = array<i64: 32, 16>}, {pipeline_mode = #tpu.pipeline_mode<synchronous>, transform_indices = @transform_2, window_bounds = array<i64: 2, 16>}, {pipeline_mode = #tpu.pipeline_mode<synchronous>, transform_indices = @transform_3, window_bounds = array<i64: 16, 2>}, {transform_indices = @transform_4, window_bounds = array<i64: 16, 18>}, {transform_indices = @transform_5, window_bounds = array<i64: 2, 16>}, {transform_indices = @transform_6, window_bounds = array<i64: 16, 2>}]} {
    %c0 = arith.constant 0 : index
    %c0_0 = arith.constant 0 : index
    %0 = vector.load %arg1[%c0, %c0_0] : memref<16x32xbf16, #tpu.memory_space<vmem>>, vector<16x32xbf16>
    %c0_1 = arith.constant 0 : index
    %c0_2 = arith.constant 0 : index
    %1 = vector.load %arg2[%c0_1, %c0_2] : memref<32x16xbf16, #tpu.memory_space<vmem>>, vector<32x16xbf16>
    %cst = arith.constant dense<0.000000e+00> : vector<16x16xf32>
    %2 = tpu.matmul %0, %1, %cst {dimension_numbers = #tpu.dot_dimension_numbers<[1], [0], [0], [1], [0, 0, 1, 1], [], []>} : vector<16x32xbf16>, vector<32x16xbf16>, vector<16x16xf32> -> vector<16x16xf32>
    %3 = arith.truncf %2 : vector<16x16xf32> to vector<16x16xbf16>
    %c0_3 = arith.constant 0 : index
    %c0_4 = arith.constant 0 : index
    %4 = vector.load %arg4[%c0_3, %c0_4] : memref<16x2xbf16, #tpu.memory_space<vmem>>, vector<16x2xbf16>
    %cst_5 = arith.constant dense<0.000000e+00> : vector<16x2xf32>
    %5 = tpu.matmul %3, %4, %cst_5 {dimension_numbers = #tpu.dot_dimension_numbers<[1], [0], [0], [1], [0, 0, 1, 1], [], []>} : vector<16x16xbf16>, vector<16x2xbf16>, vector<16x2xf32> -> vector<16x2xf32>
    %c0_6 = arith.constant 0 : index
    %c0_7 = arith.constant 0 : index
    %6 = vector.load %arg7[%c0_6, %c0_7] : memref<16x2xf32, #tpu.memory_space<vmem>>, vector<16x2xf32>
    tpu.vector_store %arg7[%c0_6, %c0_7], %5 {strides = array<i32>} : memref<16x2xf32, #tpu.memory_space<vmem>>, vector<16x2xf32>,
    %c0_8 = arith.constant 0 : index
    %c0_9 = arith.constant 0 : index
    %7 = vector.load %arg3[%c0_8, %c0_9] : memref<2x16xbf16, #tpu.memory_space<vmem>>, vector<2x16xbf16>
    %cst_10 = arith.constant dense<0.000000e+00> : vector<2x16xf32>
    %8 = tpu.matmul %7, %3, %cst_10 {dimension_numbers = #tpu.dot_dimension_numbers<[1], [1], [0], [0], [0, 0, 1, 0], [], []>} : vector<2x16xbf16>, vector<16x16xbf16>, vector<2x16xf32> -> vector<2x16xf32>
    %c0_11 = arith.constant 0 : index
    %c0_12 = arith.constant 0 : index
    %9 = vector.load %arg6[%c0_11, %c0_12] : memref<2x16xf32, #tpu.memory_space<vmem>>, vector<2x16xf32>
    tpu.vector_store %arg6[%c0_11, %c0_12], %8 {strides = array<i32>} : memref<2x16xf32, #tpu.memory_space<vmem>>, vector<2x16xf32>,
    %cst_13 = arith.constant 1.000000e+00 : bf16
    %10 = vector.broadcast %cst_13 : bf16 to vector<16x1xbf16>
    %11 = vector.extract_strided_slice %3 {offsets = [0, 0], sizes = [16, 8], strides = [1, 1]} : vector<16x16xbf16> to vector<16x8xbf16>
    %12 = vector.extract_strided_slice %3 {offsets = [0, 8], sizes = [16, 8], strides = [1, 1]} : vector<16x16xbf16> to vector<16x8xbf16>
    %13 = tpu.concatenate %11, %10, %12, %10 in 1 : vector<16x8xbf16>, vector<16x1xbf16>, vector<16x8xbf16>, vector<16x1xbf16> -> vector<16x18xbf16>
    %c0_14 = arith.constant 0 : index
    %c0_15 = arith.constant 0 : index
    %14 = vector.load %arg5[%c0_14, %c0_15] : memref<16x18xbf16, #tpu.memory_space<vmem>>, vector<16x18xbf16>
    tpu.vector_store %arg5[%c0_14, %c0_15], %13 {strides = array<i32>} : memref<16x18xbf16, #tpu.memory_space<vmem>>, vector<16x18xbf16>,
    return
  }
  func.func @transform_0(%arg0: i32) -> (i32, i32) {
    %c0_i32 = arith.constant 0 : i32
    %c0_i32_0 = arith.constant 0 : i32
    return %arg0, %c0_i32 : i32, i32
  }
  func.func @transform_1(%arg0: i32) -> (i32, i32) {
    %c0_i32 = arith.constant 0 : i32
    %c0_i32_0 = arith.constant 0 : i32
    %c0_i32_1 = arith.constant 0 : i32
    return %c0_i32, %c0_i32_0 : i32, i32
  }
  func.func @transform_2(%arg0: i32) -> (i32, i32) {
    %c0_i32 = arith.constant 0 : i32
    %c0_i32_0 = arith.constant 0 : i32
    %c0_i32_1 = arith.constant 0 : i32
    return %c0_i32, %c0_i32_0 : i32, i32
  }
  func.func @transform_3(%arg0: i32) -> (i32, i32) {
    %c0_i32 = arith.constant 0 : i32
    %c0_i32_0 = arith.constant 0 : i32
    %c0_i32_1 = arith.constant 0 : i32
    return %c0_i32, %c0_i32_0 : i32, i32
  }
  func.func @transform_4(%arg0: i32) -> (i32, i32) {
    %c0_i32 = arith.constant 0 : i32
    %c0_i32_0 = arith.constant 0 : i32
    return %arg0, %c0_i32 : i32, i32
  }
  func.func @transform_5(%arg0: i32) -> (i32, i32) {
    %c0_i32 = arith.constant 0 : i32
    %c0_i32_0 = arith.constant 0 : i32
    return %c0_i32, %arg0 : i32, i32
  }
  func.func @transform_6(%arg0: i32) -> (i32, i32) {
    %c0_i32 = arith.constant 0 : i32
    %c0_i32_0 = arith.constant 0 : i32
    return %arg0, %c0_i32 : i32, i32
  }
}

module attributes {stable_mosaic.version = 11 : i64} {
  func.func @_gat_attention_kernel(%arg0: i32, %arg1: i32, %arg2: memref<1x1xi32, #tpu.memory_space<smem>>, %arg3: memref<1xi32, #tpu.memory_space<smem>>, %arg4: memref<16x2xf32, #tpu.memory_space<vmem>>, %arg5: memref<2x16xf32, #tpu.memory_space<vmem>>, %arg6: memref<16x18xbf16, #tpu.memory_space<vmem>>, %arg7: memref<16x16xi8, #tpu.memory_space<vmem>>, %arg8: memref<16x16xf32, #tpu.memory_space<vmem>>, %arg9: memref<2x16x1xf32, #tpu.memory_space<vmem>>, %arg10: memref<2x16x9xf32, #tpu.memory_space<vmem>>) attributes {dimension_semantics = [#tpu.dimension_semantics<parallel>, #tpu.dimension_semantics<arbitrary>], iteration_bounds = array<i64: 1, 1>, scalar_prefetch = 2 : i64, scratch_operands = 2 : i64, tpu.core_type = #tpu.core_type<tc>, window_params = [{transform_indices = @transform_0, window_bounds = array<i64: 16, 2>}, {transform_indices = @transform_1, window_bounds = array<i64: 2, 16>}, {transform_indices = @transform_2, window_bounds = array<i64: 16, 18>}, {transform_indices = @transform_3, window_bounds = array<i64: 16, 16>}, {transform_indices = @transform_4, window_bounds = array<i64: 16, 16>}]} {
    %c0_i32 = arith.constant 0 : i32
    %0 = arith.cmpi eq, %arg1, %c0_i32 : i32
    %1 = arith.extui %0 : i1 to i32
    %c0_i32_0 = arith.constant 0 : i32
    %2 = arith.cmpi ne, %1, %c0_i32_0 : i32
    scf.if %2 {
      %cst = arith.constant -1.000000e+30 : f32
      %11 = vector.broadcast %cst : f32 to vector<2x16x1xf32>
      %c0 = arith.constant 0 : index
      %c0_4 = arith.constant 0 : index
      %c0_5 = arith.constant 0 : index
      %12 = vector.load %arg9[%c0, %c0_4, %c0_5] : memref<2x16x1xf32, #tpu.memory_space<vmem>>, vector<2x16x1xf32>
      tpu.vector_store %arg9[%c0, %c0_4, %c0_5], %11 {strides = array<i32>} : memref<2x16x1xf32, #tpu.memory_space<vmem>>, vector<2x16x1xf32>,
      %cst_6 = arith.constant 0.000000e+00 : f32
      %13 = vector.broadcast %cst_6 : f32 to vector<2x16x9xf32>
      %c0_7 = arith.constant 0 : index
      %c0_8 = arith.constant 0 : index
      %c0_9 = arith.constant 0 : index
      %14 = vector.load %arg10[%c0_7, %c0_8, %c0_9] : memref<2x16x9xf32, #tpu.memory_space<vmem>>, vector<2x16x9xf32>
      tpu.vector_store %arg10[%c0_7, %c0_8, %c0_9], %13 {strides = array<i32>} : memref<2x16x9xf32, #tpu.memory_space<vmem>>, vector<2x16x9xf32>,
    } else {
    }
    %3 = arith.index_cast %arg0 : i32 to index
    %4 = memref.load %arg3[%3] : memref<1xi32, #tpu.memory_space<smem>>
    %5 = arith.cmpi slt, %arg1, %4 : i32
    %6 = arith.extui %5 : i1 to i32
    %c0_i32_1 = arith.constant 0 : i32
    %7 = arith.cmpi ne, %6, %c0_i32_1 : i32
    scf.if %7 {
      %c0 = arith.constant 0 : index
      %c0_4 = arith.constant 0 : index
      %11 = vector.load %arg7[%c0, %c0_4] : memref<16x16xi8, #tpu.memory_space<vmem>>, vector<16x16xi8>
      %12 = arith.sitofp %11 : vector<16x16xi8> to vector<16x16xf32>
      %cst = arith.constant 5.000000e-01 : f32
      %13 = vector.broadcast %cst : f32 to vector<16x16xf32>
      %14 = arith.cmpf ogt, %12, %13 : vector<16x16xf32>
      %cst_5 = arith.constant 0.000000e+00 : f32
      %cst_6 = arith.constant -1.000000e+30 : f32
      %15 = vector.broadcast %cst_5 : f32 to vector<16x16xf32>
      %16 = vector.broadcast %cst_6 : f32 to vector<16x16xf32>
      %17 = arith.select %14, %15, %16 : vector<16x16xi1>, vector<16x16xf32>
      %c0_7 = arith.constant 0 : index
      %c0_8 = arith.constant 0 : index
      %18 = vector.load %arg6[%c0_7, %c0_8] : memref<16x18xbf16, #tpu.memory_space<vmem>>, vector<16x18xbf16>
      %c0_9 = arith.constant 0 : index
      %c0_10 = arith.constant 0 : index
      %19 = vector.load %arg4[%c0_9, %c0_10] : memref<16x2xf32, #tpu.memory_space<vmem>>, vector<16x2xf32>
      %c0_11 = arith.constant 0 : index
      %c0_12 = arith.constant 0 : index
      %20 = vector.load %arg5[%c0_11, %c0_12] : memref<2x16xf32, #tpu.memory_space<vmem>>, vector<2x16xf32>
      %21 = vector.extract_strided_slice %19 {offsets = [0, 0], sizes = [16, 1], strides = [1, 1]} : vector<16x2xf32> to vector<16x1xf32>
      %22 = vector.extract_strided_slice %20 {offsets = [0, 0], sizes = [1, 16], strides = [1, 1]} : vector<2x16xf32> to vector<1x16xf32>
      %23 = vector.broadcast %21 : vector<16x1xf32> to vector<16x16xf32>
      %24 = vector.broadcast %22 : vector<1x16xf32> to vector<16x16xf32>
      %25 = arith.addf %23, %24 : vector<16x16xf32>
      %cst_13 = arith.constant 0.000000e+00 : f32
      %26 = vector.broadcast %cst_13 : f32 to vector<16x16xf32>
      %27 = arith.cmpf ogt, %25, %26 : vector<16x16xf32>
      %cst_14 = arith.constant 0.00999999977 : f32
      %28 = vector.broadcast %cst_14 : f32 to vector<16x16xf32>
      %29 = arith.mulf %28, %25 : vector<16x16xf32>
      %30 = arith.select %27, %25, %29 : vector<16x16xi1>, vector<16x16xf32>
      %31 = arith.addf %30, %17 : vector<16x16xf32>
      %c0_15 = arith.constant 0 : index
      %c0_16 = arith.constant 0 : index
      %c0_17 = arith.constant 0 : index
      %32 = vector.load %arg9[%c0_15, %c0_16, %c0_17] : memref<2x16x1xf32, #tpu.memory_space<vmem>>, vector<1x16x1xf32>
      %33 = vector.shape_cast %32 : vector<1x16x1xf32> to vector<16x1xf32>
      %cst_18 = arith.constant dense<0xFF800000> : vector<16xf32>
      %34 = vector.multi_reduction <maximumf>, %31, %cst_18 [1] : vector<16x16xf32> to vector<16xf32>
      %35 = vector.shape_cast %34 : vector<16xf32> to vector<16x1xf32>
      %36 = arith.maximumf %33, %35 : vector<16x1xf32>
      %37 = arith.subf %33, %36 : vector<16x1xf32>
      %38 = math.exp %37 : vector<16x1xf32>
      %39 = vector.broadcast %36 : vector<16x1xf32> to vector<16x16xf32>
      %40 = arith.subf %31, %39 : vector<16x16xf32>
      %41 = math.exp %40 : vector<16x16xf32>
      %42 = arith.truncf %41 : vector<16x16xf32> to vector<16x16xbf16>
      %43 = vector.extract_strided_slice %18 {offsets = [0, 0], sizes = [16, 9], strides = [1, 1]} : vector<16x18xbf16> to vector<16x9xbf16>
      %cst_19 = arith.constant dense<0.000000e+00> : vector<16x9xf32>
      %44 = tpu.matmul %42, %43, %cst_19 {dimension_numbers = #tpu.dot_dimension_numbers<[1], [0], [0], [1], [0, 0, 1, 1], [], []>} : vector<16x16xbf16>, vector<16x9xbf16>, vector<16x9xf32> -> vector<16x9xf32>
      %c0_20 = arith.constant 0 : index
      %c0_21 = arith.constant 0 : index
      %c0_22 = arith.constant 0 : index
      %45 = vector.load %arg10[%c0_20, %c0_21, %c0_22] : memref<2x16x9xf32, #tpu.memory_space<vmem>>, vector<1x16x9xf32>
      %46 = vector.shape_cast %45 : vector<1x16x9xf32> to vector<16x9xf32>
      %47 = vector.broadcast %38 : vector<16x1xf32> to vector<16x9xf32>
      %48 = arith.mulf %47, %46 : vector<16x9xf32>
      %49 = arith.addf %48, %44 : vector<16x9xf32>
      %c0_23 = arith.constant 0 : index
      %c0_24 = arith.constant 0 : index
      %c0_25 = arith.constant 0 : index
      %50 = vector.load %arg10[%c0_23, %c0_24, %c0_25] : memref<2x16x9xf32, #tpu.memory_space<vmem>>, vector<1x16x9xf32>
      %51 = vector.shape_cast %50 : vector<1x16x9xf32> to vector<16x9xf32>
      %52 = vector.shape_cast %49 : vector<16x9xf32> to vector<1x16x9xf32>
      tpu.vector_store %arg10[%c0_23, %c0_24, %c0_25], %52 {strides = array<i32>} : memref<2x16x9xf32, #tpu.memory_space<vmem>>, vector<1x16x9xf32>,
      %c0_26 = arith.constant 0 : index
      %c0_27 = arith.constant 0 : index
      %c0_28 = arith.constant 0 : index
      %53 = vector.load %arg9[%c0_26, %c0_27, %c0_28] : memref<2x16x1xf32, #tpu.memory_space<vmem>>, vector<1x16x1xf32>
      %54 = vector.shape_cast %53 : vector<1x16x1xf32> to vector<16x1xf32>
      %55 = vector.shape_cast %36 : vector<16x1xf32> to vector<1x16x1xf32>
      tpu.vector_store %arg9[%c0_26, %c0_27, %c0_28], %55 {strides = array<i32>} : memref<2x16x1xf32, #tpu.memory_space<vmem>>, vector<1x16x1xf32>,
      %56 = vector.extract_strided_slice %19 {offsets = [0, 1], sizes = [16, 1], strides = [1, 1]} : vector<16x2xf32> to vector<16x1xf32>
      %57 = vector.extract_strided_slice %20 {offsets = [1, 0], sizes = [1, 16], strides = [1, 1]} : vector<2x16xf32> to vector<1x16xf32>
      %58 = vector.broadcast %56 : vector<16x1xf32> to vector<16x16xf32>
      %59 = vector.broadcast %57 : vector<1x16xf32> to vector<16x16xf32>
      %60 = arith.addf %58, %59 : vector<16x16xf32>
      %cst_29 = arith.constant 0.000000e+00 : f32
      %61 = vector.broadcast %cst_29 : f32 to vector<16x16xf32>
      %62 = arith.cmpf ogt, %60, %61 : vector<16x16xf32>
      %cst_30 = arith.constant 0.00999999977 : f32
      %63 = vector.broadcast %cst_30 : f32 to vector<16x16xf32>
      %64 = arith.mulf %63, %60 : vector<16x16xf32>
      %65 = arith.select %62, %60, %64 : vector<16x16xi1>, vector<16x16xf32>
      %66 = arith.addf %65, %17 : vector<16x16xf32>
      %c1 = arith.constant 1 : index
      %c0_31 = arith.constant 0 : index
      %c0_32 = arith.constant 0 : index
      %67 = vector.load %arg9[%c1, %c0_31, %c0_32] : memref<2x16x1xf32, #tpu.memory_space<vmem>>, vector<1x16x1xf32>
      %68 = vector.shape_cast %67 : vector<1x16x1xf32> to vector<16x1xf32>
      %cst_33 = arith.constant dense<0xFF800000> : vector<16xf32>
      %69 = vector.multi_reduction <maximumf>, %66, %cst_33 [1] : vector<16x16xf32> to vector<16xf32>
      %70 = vector.shape_cast %69 : vector<16xf32> to vector<16x1xf32>
      %71 = arith.maximumf %68, %70 : vector<16x1xf32>
      %72 = arith.subf %68, %71 : vector<16x1xf32>
      %73 = math.exp %72 : vector<16x1xf32>
      %74 = vector.broadcast %71 : vector<16x1xf32> to vector<16x16xf32>
      %75 = arith.subf %66, %74 : vector<16x16xf32>
      %76 = math.exp %75 : vector<16x16xf32>
      %77 = arith.truncf %76 : vector<16x16xf32> to vector<16x16xbf16>
      %78 = vector.extract_strided_slice %18 {offsets = [0, 9], sizes = [16, 9], strides = [1, 1]} : vector<16x18xbf16> to vector<16x9xbf16>
      %cst_34 = arith.constant dense<0.000000e+00> : vector<16x9xf32>
      %79 = tpu.matmul %77, %78, %cst_34 {dimension_numbers = #tpu.dot_dimension_numbers<[1], [0], [0], [1], [0, 0, 1, 1], [], []>} : vector<16x16xbf16>, vector<16x9xbf16>, vector<16x9xf32> -> vector<16x9xf32>
      %c1_35 = arith.constant 1 : index
      %c0_36 = arith.constant 0 : index
      %c0_37 = arith.constant 0 : index
      %80 = vector.load %arg10[%c1_35, %c0_36, %c0_37] : memref<2x16x9xf32, #tpu.memory_space<vmem>>, vector<1x16x9xf32>
      %81 = vector.shape_cast %80 : vector<1x16x9xf32> to vector<16x9xf32>
      %82 = vector.broadcast %73 : vector<16x1xf32> to vector<16x9xf32>
      %83 = arith.mulf %82, %81 : vector<16x9xf32>
      %84 = arith.addf %83, %79 : vector<16x9xf32>
      %c1_38 = arith.constant 1 : index
      %c0_39 = arith.constant 0 : index
      %c0_40 = arith.constant 0 : index
      %85 = vector.load %arg10[%c1_38, %c0_39, %c0_40] : memref<2x16x9xf32, #tpu.memory_space<vmem>>, vector<1x16x9xf32>
      %86 = vector.shape_cast %85 : vector<1x16x9xf32> to vector<16x9xf32>
      %87 = vector.shape_cast %84 : vector<16x9xf32> to vector<1x16x9xf32>
      tpu.vector_store %arg10[%c1_38, %c0_39, %c0_40], %87 {strides = array<i32>} : memref<2x16x9xf32, #tpu.memory_space<vmem>>, vector<1x16x9xf32>,
      %c1_41 = arith.constant 1 : index
      %c0_42 = arith.constant 0 : index
      %c0_43 = arith.constant 0 : index
      %88 = vector.load %arg9[%c1_41, %c0_42, %c0_43] : memref<2x16x1xf32, #tpu.memory_space<vmem>>, vector<1x16x1xf32>
      %89 = vector.shape_cast %88 : vector<1x16x1xf32> to vector<16x1xf32>
      %90 = vector.shape_cast %71 : vector<16x1xf32> to vector<1x16x1xf32>
      tpu.vector_store %arg9[%c1_41, %c0_42, %c0_43], %90 {strides = array<i32>} : memref<2x16x1xf32, #tpu.memory_space<vmem>>, vector<1x16x1xf32>,
    } else {
    }
    %c0_i32_2 = arith.constant 0 : i32
    %8 = arith.cmpi eq, %arg1, %c0_i32_2 : i32
    %9 = arith.extui %8 : i1 to i32
    %c0_i32_3 = arith.constant 0 : i32
    %10 = arith.cmpi ne, %9, %c0_i32_3 : i32
    scf.if %10 {
      %c0 = arith.constant 0 : index
      %c0_4 = arith.constant 0 : index
      %c0_5 = arith.constant 0 : index
      %11 = vector.load %arg10[%c0, %c0_4, %c0_5] : memref<2x16x9xf32, #tpu.memory_space<vmem>>, vector<1x16x9xf32>
      %12 = vector.shape_cast %11 : vector<1x16x9xf32> to vector<16x9xf32>
      %13 = vector.extract_strided_slice %12 {offsets = [0, 8], sizes = [16, 1], strides = [1, 1]} : vector<16x9xf32> to vector<16x1xf32>
      %cst = arith.constant 1.000000e-30 : f32
      %14 = vector.broadcast %cst : f32 to vector<16x1xf32>
      %15 = arith.maximumf %13, %14 : vector<16x1xf32>
      %16 = tpu.reciprocal %15 {approx = true} : vector<16x1xf32> -> vector<16x1xf32>
      %17 = vector.extract_strided_slice %12 {offsets = [0, 0], sizes = [16, 8], strides = [1, 1]} : vector<16x9xf32> to vector<16x8xf32>
      %18 = vector.broadcast %16 : vector<16x1xf32> to vector<16x8xf32>
      %19 = arith.mulf %17, %18 : vector<16x8xf32>
      %c0_6 = arith.constant 0 : index
      %c0_7 = arith.constant 0 : index
      %c0_8 = arith.constant 0 : index
      %20 = vector.load %arg9[%c0_6, %c0_7, %c0_8] : memref<2x16x1xf32, #tpu.memory_space<vmem>>, vector<1x16x1xf32>
      %21 = vector.shape_cast %20 : vector<1x16x1xf32> to vector<16x1xf32>
      %cst_9 = arith.constant -1.000000e+29 : f32
      %22 = vector.broadcast %cst_9 : f32 to vector<16x1xf32>
      %23 = arith.cmpf ogt, %21, %22 : vector<16x1xf32>
      %cst_10 = arith.constant 0.000000e+00 : f32
      %24 = vector.shape_cast %23 : vector<16x1xi1> to vector<16x1xi1>
      %25 = vector.broadcast %24 : vector<16x1xi1> to vector<16x8xi1>
      %26 = vector.broadcast %cst_10 : f32 to vector<16x8xf32>
      %27 = arith.select %25, %19, %26 : vector<16x8xi1>, vector<16x8xf32>
      %c1 = arith.constant 1 : index
      %c0_11 = arith.constant 0 : index
      %c0_12 = arith.constant 0 : index
      %28 = vector.load %arg10[%c1, %c0_11, %c0_12] : memref<2x16x9xf32, #tpu.memory_space<vmem>>, vector<1x16x9xf32>
      %29 = vector.shape_cast %28 : vector<1x16x9xf32> to vector<16x9xf32>
      %30 = vector.extract_strided_slice %29 {offsets = [0, 8], sizes = [16, 1], strides = [1, 1]} : vector<16x9xf32> to vector<16x1xf32>
      %cst_13 = arith.constant 1.000000e-30 : f32
      %31 = vector.broadcast %cst_13 : f32 to vector<16x1xf32>
      %32 = arith.maximumf %30, %31 : vector<16x1xf32>
      %33 = tpu.reciprocal %32 {approx = true} : vector<16x1xf32> -> vector<16x1xf32>
      %34 = vector.extract_strided_slice %29 {offsets = [0, 0], sizes = [16, 8], strides = [1, 1]} : vector<16x9xf32> to vector<16x8xf32>
      %35 = vector.broadcast %33 : vector<16x1xf32> to vector<16x8xf32>
      %36 = arith.mulf %34, %35 : vector<16x8xf32>
      %c1_14 = arith.constant 1 : index
      %c0_15 = arith.constant 0 : index
      %c0_16 = arith.constant 0 : index
      %37 = vector.load %arg9[%c1_14, %c0_15, %c0_16] : memref<2x16x1xf32, #tpu.memory_space<vmem>>, vector<1x16x1xf32>
      %38 = vector.shape_cast %37 : vector<1x16x1xf32> to vector<16x1xf32>
      %cst_17 = arith.constant -1.000000e+29 : f32
      %39 = vector.broadcast %cst_17 : f32 to vector<16x1xf32>
      %40 = arith.cmpf ogt, %38, %39 : vector<16x1xf32>
      %cst_18 = arith.constant 0.000000e+00 : f32
      %41 = vector.shape_cast %40 : vector<16x1xi1> to vector<16x1xi1>
      %42 = vector.broadcast %41 : vector<16x1xi1> to vector<16x8xi1>
      %43 = vector.broadcast %cst_18 : f32 to vector<16x8xf32>
      %44 = arith.select %42, %36, %43 : vector<16x8xi1>, vector<16x8xf32>
      %45 = tpu.concatenate %27, %44 in 1 : vector<16x8xf32>, vector<16x8xf32> -> vector<16x16xf32>
      %c0_19 = arith.constant 0 : index
      %c0_20 = arith.constant 0 : index
      %46 = vector.load %arg8[%c0_19, %c0_20] : memref<16x16xf32, #tpu.memory_space<vmem>>, vector<16x16xf32>
      tpu.vector_store %arg8[%c0_19, %c0_20], %45 {strides = array<i32>} : memref<16x16xf32, #tpu.memory_space<vmem>>, vector<16x16xf32>,
    } else {
    }
    return
  }
  func.func @transform_0(%arg0: i32, %arg1: i32, %arg2: memref<1x1xi32, #tpu.memory_space<smem>>, %arg3: memref<1xi32, #tpu.memory_space<smem>>) -> (i32, i32) {
    %c0_i32 = arith.constant 0 : i32
    %c0_i32_0 = arith.constant 0 : i32
    return %arg0, %c0_i32 : i32, i32
  }
  func.func @transform_1(%arg0: i32, %arg1: i32, %arg2: memref<1x1xi32, #tpu.memory_space<smem>>, %arg3: memref<1xi32, #tpu.memory_space<smem>>) -> (i32, i32) {
    %0 = arith.index_cast %arg0 : i32 to index
    %1 = arith.index_cast %arg1 : i32 to index
    %2 = memref.load %arg2[%0, %1] : memref<1x1xi32, #tpu.memory_space<smem>>
    %c0_i32 = arith.constant 0 : i32
    %c0_i32_0 = arith.constant 0 : i32
    return %c0_i32, %2 : i32, i32
  }
  func.func @transform_2(%arg0: i32, %arg1: i32, %arg2: memref<1x1xi32, #tpu.memory_space<smem>>, %arg3: memref<1xi32, #tpu.memory_space<smem>>) -> (i32, i32) {
    %0 = arith.index_cast %arg0 : i32 to index
    %1 = arith.index_cast %arg1 : i32 to index
    %2 = memref.load %arg2[%0, %1] : memref<1x1xi32, #tpu.memory_space<smem>>
    %c0_i32 = arith.constant 0 : i32
    %c0_i32_0 = arith.constant 0 : i32
    return %2, %c0_i32 : i32, i32
  }
  func.func @transform_3(%arg0: i32, %arg1: i32, %arg2: memref<1x1xi32, #tpu.memory_space<smem>>, %arg3: memref<1xi32, #tpu.memory_space<smem>>) -> (i32, i32) {
    %0 = arith.index_cast %arg0 : i32 to index
    %1 = arith.index_cast %arg1 : i32 to index
    %2 = memref.load %arg2[%0, %1] : memref<1x1xi32, #tpu.memory_space<smem>>
    %c0_i32 = arith.constant 0 : i32
    return %arg0, %2 : i32, i32
  }
  func.func @transform_4(%arg0: i32, %arg1: i32, %arg2: memref<1x1xi32, #tpu.memory_space<smem>>, %arg3: memref<1xi32, #tpu.memory_space<smem>>) -> (i32, i32) {
    %c0_i32 = arith.constant 0 : i32
    %c0_i32_0 = arith.constant 0 : i32
    return %arg0, %c0_i32 : i32, i32
  }
}

</mosaic_0001>

<llo_original>
// kernel: gat_forward.4
$region0: #{gat_forward.4}
  #allocation0 [shape = 'u32[]', space=smem, size = 0x4, offset = 0x4, fixed_abs, tag = 'smem constant byte address 0x4 - core index']
  #allocation1 [shape = 'u32[144,128]{1,0:T(1,128)}', space=vmem, size = 0x12000, scoped, tag = 'internal scratch']
  %s0 = inlined_call_operand.vmem [shape: bf16[16,8], index: 0, kind: input, shape index: {}]
  %s1 = inlined_call_operand.vmem [shape: bf16[8,32], index: 1, kind: input, shape index: {}]
  %s2 = inlined_call_operand.vmem [shape: bf16[2,32], index: 2, kind: input, shape index: {}]
  %s3 = inlined_call_operand.vmem [shape: bf16[32,2], index: 3, kind: input, shape index: {}]
  %s4 = inlined_call_operand.vmem [shape: bf16[16,34], index: 4, kind: output, shape index: {0}]
  %s5 = inlined_call_operand.vmem [shape: f32[2,16], index: 5, kind: output, shape index: {1}]
  %s6 = inlined_call_operand.vmem [shape: f32[16,2], index: 6, kind: output, shape index: {2}]
  %7 = xla_tuple %s4, %s5, %s6
  %s8 = sld [smem:[#allocation0]]
  $region42: #{gat_forward.4} parent=0
    _
  %s10 = ssub.s32 1, %s8
  %s11 = scalar_select 0, %s10, %s8
  // Predicated region
  $region2: #{gat_forward.4} parent=0 // pred_check
    _
  $region3: #{gat_forward.4} parent=0 // pred_check_branch
    %13 = sbr.rel (0) target = $region5
  $region4: #{gat_forward.4} parent=0 // pred_region
    _
  $region5: #{gat_forward.4} parent=0 // pred_fallthru
    _
  // Predicated region
  $region6: #{gat_forward.4} parent=0 // pred_check
    _
  $region7: #{gat_forward.4} parent=0 // pred_check_branch
    %15 = sbr.rel (0) target = $region9
  $region8: #{gat_forward.4} parent=0 // pred_region
    _
  $region9: #{gat_forward.4} parent=0 // pred_fallthru
    _
  // Predicated region
  $region10: #{gat_forward.4} parent=0 // pred_check
    _
  $region11: #{gat_forward.4} parent=0 // pred_check_branch
    %17 = sbr.rel (0) target = $region13
  $region12: #{gat_forward.4} parent=0 // pred_region
    _
  $region13: #{gat_forward.4} parent=0 // pred_fallthru
    _
  // Predicated region
  $region14: #{gat_forward.4} parent=0 // pred_check
    _
  $region15: #{gat_forward.4} parent=0 // pred_check_branch
    %19 = sbr.rel (0) target = $region17
  $region16: #{gat_forward.4} parent=0 // pred_region
    _
  $region17: #{gat_forward.4} parent=0 // pred_fallthru
    _
  %v22 = vld [vmem:[%s0] sm:$0xf]
  %v23 = vld [vmem:[%s0 + $0x4] sm:$0xf]
  %v24 = vld [vmem:[%s1] sm:$0xf]
  %v27 = vunpack.c.l.b16 %v22
  %v28 = vunpack.c.l.b16 %v23
  %v29 = vpack.c.b16 %v28, %v27
  %vm30 = vcmask 64512
  %v32 = vsel %vm30, %v29, 0
  %vm34 = vcmask 1043456
  %v36 = vsel %vm34, %v24, 0
  %38 = vmatprep.subr.bf16.mxu0 0
  %39 = vmatpush1.bf16.msra.mxu0 0
  %40 = vmatprep.subr.bf16.mxu0 0
  %41 = vmatpush1.bf16.msra.mxu0 0
  %42 = vmatprep.subr.bf16.mxu0 0
  %43 = vmatpush1.bf16.msra.mxu0 0
  %44 = vmatprep.subr.bf16.mxu0 0
  %45 = vmatpush1.bf16.msra.mxu0 0
  %46 = vmatprep.subr.bf16.mxu0 0
  %47 = vmatpush1.bf16.msra.mxu0 0
  %48 = vmatprep.subr.bf16.mxu0 0
  %49 = vmatpush1.bf16.msra.mxu0 0
  %50 = vmatprep.subr.bf16.mxu0 0
  %51 = vmatpush1.bf16.msra.mxu0 0
  %52 = vmatprep.subr.bf16.mxu0 0
  %53 = vmatpush1.bf16.msra.mxu0 %v36
  %54 = vmatprep.subr.bf16.mxu0 0
  %55 = vmatpush2.bf16.msra.mxu0 0
  %56 = vmatprep.subr.bf16.mxu0 0
  %57 = vmatpush2.bf16.msra.mxu0 0
  %58 = vmatprep.subr.bf16.mxu0 0
  %59 = vmatpush2.bf16.msra.mxu0 0
  %60 = vmatprep.subr.bf16.mxu0 0
  %61 = vmatpush2.bf16.msra.mxu0 0
  %62 = vmatprep.subr.bf16.mxu0 0
  %63 = vmatpush2.bf16.msra.mxu0 0
  %64 = vmatprep.subr.bf16.mxu0 0
  %65 = vmatpush2.bf16.msra.mxu0 0
  %66 = vmatprep.subr.bf16.mxu0 0
  %67 = vmatpush2.bf16.msra.mxu0 0
  %68 = vmatprep.subr.bf16.mxu0 0
  %69 = vmatpush2.bf16.msra.mxu0 0
  %70 = vmatprep.mubr.bf16.mxu0 0
  %71 = vmatmul.mubr.bf16.gmra.mxu0 %v32
  %v72 = vpop.f32.mrf.mxu0
  %v73 = vadd.f32 0.0, %v72
  %v74 = vpop.f32.mrf.mxu0
  %v75 = vpop.f32.mrf.mxu0
  %v76 = vadd.f32 0.0, %v75
  %v77 = vpop.f32.mrf.mxu0
  %78 = vdwg.mxu0
  %v79 = vpack.c.bf16 %v76, %v73
  %v80 = vld [vmem:[%s3] sm:$0xf]
  %v81 = vld [vmem:[%s3 + $0x4] sm:$0xf]
  %v82 = vld [vmem:[%s3 + $0x8] sm:$0xf]
  %v83 = vld [vmem:[%s3 + $0xc] sm:$0xf]
  %v88 = vunpack.c.l.b16 %v80
  %v89 = vunpack.c.l.b16 %v81
  %v90 = vunpack.c.l.b16 %v82
  %v91 = vunpack.c.l.b16 %v83
  %v92 = vpack.c.b16 %v89, %v88
  %v93 = vpack.c.b16 %v91, %v90
  %vm96 = vcmask 261120
  %v98 = vsel %vm96, %v79, 0
  %100 = vmatprep.subr.bf16.mxu0 0
  %101 = vmatpush1.bf16.msra.mxu0 0
  %102 = vmatprep.subr.bf16.mxu0 0
  %103 = vmatpush1.bf16.msra.mxu0 0
  %104 = vmatprep.subr.bf16.mxu0 0
  %105 = vmatpush1.bf16.msra.mxu0 0
  %106 = vmatprep.subr.bf16.mxu0 0
  %107 = vmatpush1.bf16.msra.mxu0 0
  %108 = vmatprep.subr.bf16.mxu0 0
  %109 = vmatpush1.bf16.msra.mxu0 0
  %110 = vmatprep.subr.bf16.mxu0 0
  %111 = vmatpush1.bf16.msra.mxu0 0
  %112 = vmatprep.subr.bf16.mxu0 0
  %113 = vmatpush1.bf16.msra.mxu0 %v93
  %114 = vmatprep.subr.bf16.mxu0 0
  %115 = vmatpush1.bf16.msra.mxu0 %v92
  %116 = vmatprep.subr.bf16.mxu0 0
  %117 = vmatpush2.bf16.msra.mxu0 0
  %118 = vmatprep.subr.bf16.mxu0 0
  %119 = vmatpush2.bf16.msra.mxu0 0
  %120 = vmatprep.subr.bf16.mxu0 0
  %121 = vmatpush2.bf16.msra.mxu0 0
  %122 = vmatprep.subr.bf16.mxu0 0
  %123 = vmatpush2.bf16.msra.mxu0 0
  %124 = vmatprep.subr.bf16.mxu0 0
  %125 = vmatpush2.bf16.msra.mxu0 0
  %126 = vmatprep.subr.bf16.mxu0 0
  %127 = vmatpush2.bf16.msra.mxu0 0
  %128 = vmatprep.subr.bf16.mxu0 0
  %129 = vmatpush2.bf16.msra.mxu0 0
  %130 = vmatprep.subr.bf16.mxu0 0
  %131 = vmatpush2.bf16.msra.mxu0 0
  %132 = vmatprep.mubr.bf16.mxu0 0
  %133 = vmatmul.mubr.bf16.gmra.mxu0 %v98
  %v134 = vpop.f32.mrf.mxu0
  %v135 = vadd.f32 0.0, %v134
  %v136 = vpop.f32.mrf.mxu0
  %v137 = vpop.f32.mrf.mxu0
  %v138 = vadd.f32 0.0, %v137
  %v139 = vpop.f32.mrf.mxu0
  %140 = vdwg.mxu0
  %vm141 = vcmask 15360
  %142 = vst.msk [vmem:[%s6] sm:$0xff] %vm141, %v135
  %143 = vst.msk [vmem:[%s6 + $0x8] sm:$0xff] %vm141, %v138
  %v144 = vld [vmem:[%s2] sm:$0x1]
  %v146 = vsel %vm96, %v144, 0
  %148 = vmatprep.subr.bf16.mxu0 0
  %149 = vmatpush1.bf16.xpose.msra.mxu0 0
  %150 = vmatprep.subr.bf16.mxu0 0
  %151 = vmatpush1.bf16.xpose.msra.mxu0 0
  %152 = vmatprep.subr.bf16.mxu0 0
  %153 = vmatpush1.bf16.xpose.msra.mxu0 0
  %154 = vmatprep.subr.bf16.mxu0 0
  %155 = vmatpush1.bf16.xpose.msra.mxu0 0
  %156 = vmatprep.subr.bf16.mxu0 0
  %157 = vmatpush1.bf16.xpose.msra.mxu0 0
  %158 = vmatprep.subr.bf16.mxu0 0
  %159 = vmatpush1.bf16.xpose.msra.mxu0 0
  %160 = vmatprep.subr.bf16.mxu0 0
  %161 = vmatpush1.bf16.xpose.msra.mxu0 0
  %162 = vmatprep.subr.bf16.mxu0 0
  %163 = vmatpush1.bf16.xpose.msra.mxu0 %v98
  %164 = vmatprep.subr.bf16.mxu0 0
  %165 = vmatpush2.bf16.xpose.msra.mxu0 0
  %166 = vmatprep.subr.bf16.mxu0 0
  %167 = vmatpush2.bf16.xpose.msra.mxu0 0
  %168 = vmatprep.subr.bf16.mxu0 0
  %169 = vmatpush2.bf16.xpose.msra.mxu0 0
  %170 = vmatprep.subr.bf16.mxu0 0
  %171 = vmatpush2.bf16.xpose.msra.mxu0 0
  %172 = vmatprep.subr.bf16.mxu0 0
  %173 = vmatpush2.bf16.xpose.msra.mxu0 0
  %174 = vmatprep.subr.bf16.mxu0 0
  %175 = vmatpush2.bf16.xpose.msra.mxu0 0
  %176 = vmatprep.subr.bf16.mxu0 0
  %177 = vmatpush2.bf16.xpose.msra.mxu0 0
  %178 = vmatprep.subr.bf16.mxu0 0
  %179 = vmatpush2.bf16.xpose.msra.mxu0 0
  %180 = vmatprep.mubr.bf16.mxu0 0
  %181 = vmatmul.mubr.bf16.gmra.mxu0 %v146
  %v182 = vpop.f32.mrf.mxu0
  %v183 = vadd.f32 0.0, %v182
  %v184 = vpop.f32.mrf.mxu0
  %v185 = vpop.f32.mrf.mxu0
  %v186 = vpop.f32.mrf.mxu0
  %187 = vdwg.mxu0
  %vm188 = vcmask 123904
  %189 = vst.msk [vmem:[%s5] sm:$0x3] %vm188, %v183
  %191 = vrot.lane.b32.xlu0 %v79, 1
  %v192 = vpop.permute.xlu0 %191
  %vm193 = vcmask 130048
  %v195 = vsel %vm193, %v79, 1065369472
  %vm196 = vcmask 138240
  %v198 = vsel %vm196, %v195, %v192
  %vm199 = vcmask 269312
  %v200 = vsel %vm199, %v198, 1065369472
  %v202 = vunpack.c.l.b16 %v200
  %v203 = vunpack.c.h.b16 %v200
  %v204 = vpack.c.b16 %v202, %v202
  %v205 = vpack.c.b16 %v203, %v203
  %vm208 = vcmask 273408
  %209 = vst.msk [vmem:[%s4] sm:$0xf] %vm208, %v204
  %210 = vst.msk [vmem:[%s4 + $0x4] sm:$0xf] %vm208, %v205
  // Predicated region
  $region18: #{gat_forward.4} parent=0 // pred_check
    _
  $region19: #{gat_forward.4} parent=0 // pred_check_branch
    %212 = sbr.rel (0) target = $region21
  $region20: #{gat_forward.4} parent=0 // pred_region
    _
  $region21: #{gat_forward.4} parent=0 // pred_fallthru
    _
  // Predicated region
  $region22: #{gat_forward.4} parent=0 // pred_check
    _
  $region23: #{gat_forward.4} parent=0 // pred_check_branch
    %214 = sbr.rel (0) target = $region25
  $region24: #{gat_forward.4} parent=0 // pred_region
    _
  $region25: #{gat_forward.4} parent=0 // pred_fallthru
    _
  // Predicated region
  $region26: #{gat_forward.4} parent=0 // pred_check
    _
  $region27: #{gat_forward.4} parent=0 // pred_check_branch
    %216 = sbr.rel (0) target = $region29
  $region28: #{gat_forward.4} parent=0 // pred_region
    _
  $region29: #{gat_forward.4} parent=0 // pred_fallthru
    _
  // Predicated region
  $region30: #{gat_forward.4} parent=0 // pred_check
    _
  $region31: #{gat_forward.4} parent=0 // pred_check_branch
    %218 = sbr.rel (0) target = $region33
  $region32: #{gat_forward.4} parent=0 // pred_region
    _
  $region33: #{gat_forward.4} parent=0 // pred_fallthru
    _
  // Predicated region
  $region34: #{gat_forward.4} parent=0 // pred_check
    _
  $region35: #{gat_forward.4} parent=0 // pred_check_branch
    %220 = sbr.rel (0) target = $region37
  $region36: #{gat_forward.4} parent=0 // pred_region
    _
  $region37: #{gat_forward.4} parent=0 // pred_fallthru
    _
  // Predicated region
  $region38: #{gat_forward.4} parent=0 // pred_check
    _
  $region39: #{gat_forward.4} parent=0 // pred_check_branch
    %222 = sbr.rel (0) target = $region41
  $region40: #{gat_forward.4} parent=0 // pred_region
    _
  $region41: #{gat_forward.4} parent=0 // pred_fallthru
    _

// kernel: gat_forward.6
$region0: #{gat_forward.6}
  #allocation0 [shape = 'u32[]', space=smem, size = 0x4, offset = 0x4, fixed_abs, tag = 'smem constant byte address 0x4 - core index']
  #allocation1 [shape = 'u32[144,128]{1,0:T(1,128)}', space=vmem, size = 0x12000, scoped, tag = 'internal scratch']
  %s0 = inlined_call_operand.vmem [shape: bf16[16,32], index: 0, kind: input, shape index: {}]
  %s1 = inlined_call_operand.vmem [shape: bf16[32,16], index: 1, kind: input, shape index: {}]
  %s2 = inlined_call_operand.vmem [shape: bf16[2,16], index: 2, kind: input, shape index: {}]
  %s3 = inlined_call_operand.vmem [shape: bf16[16,2], index: 3, kind: input, shape index: {}]
  %s4 = inlined_call_operand.vmem [shape: bf16[16,18], index: 4, kind: output, shape index: {0}]
  %s5 = inlined_call_operand.vmem [shape: f32[2,16], index: 5, kind: output, shape index: {1}]
  %s6 = inlined_call_operand.vmem [shape: f32[16,2], index: 6, kind: output, shape index: {2}]
  %7 = xla_tuple %s4, %s5, %s6
  %s8 = sld [smem:[#allocation0]]
  $region42: #{gat_forward.6} parent=0
    _
  %s10 = ssub.s32 1, %s8
  %s11 = scalar_select 0, %s10, %s8
  // Predicated region
  $region2: #{gat_forward.6} parent=0 // pred_check
    _
  $region3: #{gat_forward.6} parent=0 // pred_check_branch
    %13 = sbr.rel (0) target = $region5
  $region4: #{gat_forward.6} parent=0 // pred_region
    _
  $region5: #{gat_forward.6} parent=0 // pred_fallthru
    _
  // Predicated region
  $region6: #{gat_forward.6} parent=0 // pred_check
    _
  $region7: #{gat_forward.6} parent=0 // pred_check_branch
    %15 = sbr.rel (0) target = $region9
  $region8: #{gat_forward.6} parent=0 // pred_region
    _
  $region9: #{gat_forward.6} parent=0 // pred_fallthru
    _
  // Predicated region
  $region10: #{gat_forward.6} parent=0 // pred_check
    _
  $region11: #{gat_forward.6} parent=0 // pred_check_branch
    %17 = sbr.rel (0) target = $region13
  $region12: #{gat_forward.6} parent=0 // pred_region
    _
  $region13: #{gat_forward.6} parent=0 // pred_fallthru
    _
  // Predicated region
  $region14: #{gat_forward.6} parent=0 // pred_check
    _
  $region15: #{gat_forward.6} parent=0 // pred_check_branch
    %19 = sbr.rel (0) target = $region17
  $region16: #{gat_forward.6} parent=0 // pred_region
    _
  $region17: #{gat_forward.6} parent=0 // pred_fallthru
    _
  %v22 = vld [vmem:[%s0] sm:$0xf]
  %v23 = vld [vmem:[%s0 + $0x4] sm:$0xf]
  %v24 = vld [vmem:[%s1] sm:$0xf]
  %v25 = vld [vmem:[%s1 + $0x4] sm:$0xf]
  %v26 = vld [vmem:[%s1 + $0x8] sm:$0xf]
  %v27 = vld [vmem:[%s1 + $0xc] sm:$0xf]
  %v30 = vunpack.c.l.b16 %v22
  %v31 = vunpack.c.l.b16 %v23
  %v32 = vpack.c.b16 %v31, %v30
  %v37 = vunpack.c.l.b16 %v24
  %v38 = vunpack.c.l.b16 %v25
  %v39 = vunpack.c.l.b16 %v26
  %v40 = vunpack.c.l.b16 %v27
  %v41 = vpack.c.b16 %v38, %v37
  %v42 = vpack.c.b16 %v40, %v39
  %vm45 = vcmask 261120
  %v47 = vsel %vm45, %v32, 0
  %49 = vmatprep.subr.bf16.mxu0 0
  %50 = vmatpush1.bf16.msra.mxu0 0
  %51 = vmatprep.subr.bf16.mxu0 0
  %52 = vmatpush1.bf16.msra.mxu0 0
  %53 = vmatprep.subr.bf16.mxu0 0
  %54 = vmatpush1.bf16.msra.mxu0 0
  %55 = vmatprep.subr.bf16.mxu0 0
  %56 = vmatpush1.bf16.msra.mxu0 0
  %57 = vmatprep.subr.bf16.mxu0 0
  %58 = vmatpush1.bf16.msra.mxu0 0
  %59 = vmatprep.subr.bf16.mxu0 0
  %60 = vmatpush1.bf16.msra.mxu0 0
  %61 = vmatprep.subr.bf16.mxu0 0
  %62 = vmatpush1.bf16.msra.mxu0 %v42
  %63 = vmatprep.subr.bf16.mxu0 0
  %64 = vmatpush1.bf16.msra.mxu0 %v41
  %65 = vmatprep.subr.bf16.mxu0 0
  %66 = vmatpush2.bf16.msra.mxu0 0
  %67 = vmatprep.subr.bf16.mxu0 0
  %68 = vmatpush2.bf16.msra.mxu0 0
  %69 = vmatprep.subr.bf16.mxu0 0
  %70 = vmatpush2.bf16.msra.mxu0 0
  %71 = vmatprep.subr.bf16.mxu0 0
  %72 = vmatpush2.bf16.msra.mxu0 0
  %73 = vmatprep.subr.bf16.mxu0 0
  %74 = vmatpush2.bf16.msra.mxu0 0
  %75 = vmatprep.subr.bf16.mxu0 0
  %76 = vmatpush2.bf16.msra.mxu0 0
  %77 = vmatprep.subr.bf16.mxu0 0
  %78 = vmatpush2.bf16.msra.mxu0 0
  %79 = vmatprep.subr.bf16.mxu0 0
  %80 = vmatpush2.bf16.msra.mxu0 0
  %81 = vmatprep.mubr.bf16.mxu0 0
  %82 = vmatmul.mubr.bf16.gmra.mxu0 %v47
  %v83 = vpop.f32.mrf.mxu0
  %v84 = vadd.f32 0.0, %v83
  %v85 = vpop.f32.mrf.mxu0
  %v86 = vpop.f32.mrf.mxu0
  %v87 = vadd.f32 0.0, %v86
  %v88 = vpop.f32.mrf.mxu0
  %89 = vdwg.mxu0
  %v90 = vpack.c.bf16 %v87, %v84
  %v91 = vld [vmem:[%s3] sm:$0xf]
  %v92 = vld [vmem:[%s3 + $0x4] sm:$0xf]
  %v95 = vunpack.c.l.b16 %v91
  %v96 = vunpack.c.l.b16 %v92
  %v97 = vpack.c.b16 %v96, %v95
  %vm99 = vcmask 130048
  %v101 = vsel %vm99, %v90, 0
  %103 = vmatprep.subr.bf16.mxu0 0
  %104 = vmatpush1.bf16.msra.mxu0 0
  %105 = vmatprep.subr.bf16.mxu0 0
  %106 = vmatpush1.bf16.msra.mxu0 0
  %107 = vmatprep.subr.bf16.mxu0 0
  %108 = vmatpush1.bf16.msra.mxu0 0
  %109 = vmatprep.subr.bf16.mxu0 0
  %110 = vmatpush1.bf16.msra.mxu0 0
  %111 = vmatprep.subr.bf16.mxu0 0
  %112 = vmatpush1.bf16.msra.mxu0 0
  %113 = vmatprep.subr.bf16.mxu0 0
  %114 = vmatpush1.bf16.msra.mxu0 0
  %115 = vmatprep.subr.bf16.mxu0 0
  %116 = vmatpush1.bf16.msra.mxu0 0
  %117 = vmatprep.subr.bf16.mxu0 0
  %118 = vmatpush1.bf16.msra.mxu0 %v97
  %119 = vmatprep.subr.bf16.mxu0 0
  %120 = vmatpush2.bf16.msra.mxu0 0
  %121 = vmatprep.subr.bf16.mxu0 0
  %122 = vmatpush2.bf16.msra.mxu0 0
  %123 = vmatprep.subr.bf16.mxu0 0
  %124 = vmatpush2.bf16.msra.mxu0 0
  %125 = vmatprep.subr.bf16.mxu0 0
  %126 = vmatpush2.bf16.msra.mxu0 0
  %127 = vmatprep.subr.bf16.mxu0 0
  %128 = vmatpush2.bf16.msra.mxu0 0
  %129 = vmatprep.subr.bf16.mxu0 0
  %130 = vmatpush2.bf16.msra.mxu0 0
  %131 = vmatprep.subr.bf16.mxu0 0
  %132 = vmatpush2.bf16.msra.mxu0 0
  %133 = vmatprep.subr.bf16.mxu0 0
  %134 = vmatpush2.bf16.msra.mxu0 0
  %135 = vmatprep.mubr.bf16.mxu0 0
  %136 = vmatmul.mubr.bf16.gmra.mxu0 %v101
  %v137 = vpop.f32.mrf.mxu0
  %v138 = vadd.f32 0.0, %v137
  %v139 = vpop.f32.mrf.mxu0
  %v140 = vpop.f32.mrf.mxu0
  %v141 = vadd.f32 0.0, %v140
  %v142 = vpop.f32.mrf.mxu0
  %143 = vdwg.mxu0
  %vm144 = vcmask 15360
  %145 = vst.msk [vmem:[%s6] sm:$0xff] %vm144, %v138
  %146 = vst.msk [vmem:[%s6 + $0x8] sm:$0xff] %vm144, %v141
  %v147 = vld [vmem:[%s2] sm:$0x1]
  %v149 = vsel %vm99, %v147, 0
  %151 = vmatprep.subr.bf16.mxu0 0
  %152 = vmatpush1.bf16.xpose.msra.mxu0 0
  %153 = vmatprep.subr.bf16.mxu0 0
  %154 = vmatpush1.bf16.xpose.msra.mxu0 0
  %155 = vmatprep.subr.bf16.mxu0 0
  %156 = vmatpush1.bf16.xpose.msra.mxu0 0
  %157 = vmatprep.subr.bf16.mxu0 0
  %158 = vmatpush1.bf16.xpose.msra.mxu0 0
  %159 = vmatprep.subr.bf16.mxu0 0
  %160 = vmatpush1.bf16.xpose.msra.mxu0 0
  %161 = vmatprep.subr.bf16.mxu0 0
  %162 = vmatpush1.bf16.xpose.msra.mxu0 0
  %163 = vmatprep.subr.bf16.mxu0 0
  %164 = vmatpush1.bf16.xpose.msra.mxu0 0
  %165 = vmatprep.subr.bf16.mxu0 0
  %166 = vmatpush1.bf16.xpose.msra.mxu0 %v101
  %167 = vmatprep.subr.bf16.mxu0 0
  %168 = vmatpush2.bf16.xpose.msra.mxu0 0
  %169 = vmatprep.subr.bf16.mxu0 0
  %170 = vmatpush2.bf16.xpose.msra.mxu0 0
  %171 = vmatprep.subr.bf16.mxu0 0
  %172 = vmatpush2.bf16.xpose.msra.mxu0 0
  %173 = vmatprep.subr.bf16.mxu0 0
  %174 = vmatpush2.bf16.xpose.msra.mxu0 0
  %175 = vmatprep.subr.bf16.mxu0 0
  %176 = vmatpush2.bf16.xpose.msra.mxu0 0
  %177 = vmatprep.subr.bf16.mxu0 0
  %178 = vmatpush2.bf16.xpose.msra.mxu0 0
  %179 = vmatprep.subr.bf16.mxu0 0
  %180 = vmatpush2.bf16.xpose.msra.mxu0 0
  %181 = vmatprep.subr.bf16.mxu0 0
  %182 = vmatpush2.bf16.xpose.msra.mxu0 0
  %183 = vmatprep.mubr.bf16.mxu0 0
  %184 = vmatmul.mubr.bf16.gmra.mxu0 %v149
  %v185 = vpop.f32.mrf.mxu0
  %v186 = vadd.f32 0.0, %v185
  %v187 = vpop.f32.mrf.mxu0
  %v188 = vpop.f32.mrf.mxu0
  %v189 = vpop.f32.mrf.mxu0
  %190 = vdwg.mxu0
  %vm191 = vcmask 123904
  %192 = vst.msk [vmem:[%s5] sm:$0x3] %vm191, %v186
  %194 = vrot.lane.b32.xlu0 %v90, 1
  %v195 = vpop.permute.xlu0 %194
  %vm196 = vcmask 64512
  %v198 = vsel %vm196, %v90, 1065369472
  %vm199 = vcmask 72704
  %v201 = vsel %vm199, %v198, %v195
  %vm202 = vcmask 138240
  %v203 = vsel %vm202, %v201, 1065369472
  %v205 = vunpack.c.l.b16 %v203
  %v206 = vunpack.c.h.b16 %v203
  %v207 = vpack.c.b16 %v205, %v205
  %v208 = vpack.c.b16 %v206, %v206
  %vm211 = vcmask 142336
  %212 = vst.msk [vmem:[%s4] sm:$0xf] %vm211, %v207
  %213 = vst.msk [vmem:[%s4 + $0x4] sm:$0xf] %vm211, %v208
  // Predicated region
  $region18: #{gat_forward.6} parent=0 // pred_check
    _
  $region19: #{gat_forward.6} parent=0 // pred_check_branch
    %215 = sbr.rel (0) target = $region21
  $region20: #{gat_forward.6} parent=0 // pred_region
    _
  $region21: #{gat_forward.6} parent=0 // pred_fallthru
    _
  // Predicated region
  $region22: #{gat_forward.6} parent=0 // pred_check
    _
  $region23: #{gat_forward.6} parent=0 // pred_check_branch
    %217 = sbr.rel (0) target = $region25
  $region24: #{gat_forward.6} parent=0 // pred_region
    _
  $region25: #{gat_forward.6} parent=0 // pred_fallthru
    _
  // Predicated region
  $region26: #{gat_forward.6} parent=0 // pred_check
    _
  $region27: #{gat_forward.6} parent=0 // pred_check_branch
    %219 = sbr.rel (0) target = $region29
  $region28: #{gat_forward.6} parent=0 // pred_region
    _
  $region29: #{gat_forward.6} parent=0 // pred_fallthru
    _
  // Predicated region
  $region30: #{gat_forward.6} parent=0 // pred_check
    _
  $region31: #{gat_forward.6} parent=0 // pred_check_branch
    %221 = sbr.rel (0) target = $region33
  $region32: #{gat_forward.6} parent=0 // pred_region
    _
  $region33: #{gat_forward.6} parent=0 // pred_fallthru
    _
  // Predicated region
  $region34: #{gat_forward.6} parent=0 // pred_check
    _
  $region35: #{gat_forward.6} parent=0 // pred_check_branch
    %223 = sbr.rel (0) target = $region37
  $region36: #{gat_forward.6} parent=0 // pred_region
    _
  $region37: #{gat_forward.6} parent=0 // pred_fallthru
    _
  // Predicated region
  $region38: #{gat_forward.6} parent=0 // pred_check
    _
  $region39: #{gat_forward.6} parent=0 // pred_check_branch
    %225 = sbr.rel (0) target = $region41
  $region40: #{gat_forward.6} parent=0 // pred_region
    _
  $region41: #{gat_forward.6} parent=0 // pred_fallthru
    _

// kernel: gat_forward.5
$region0: #{gat_forward.5}
  #allocation0 [shape = 'u32[]', space=smem, size = 0x4, offset = 0x4, fixed_abs, tag = 'smem constant byte address 0x4 - core index']
  #allocation1 [shape = 'u32[144,128]{1,0:T(1,128)}', space=vmem, size = 0x12000, scoped, tag = 'internal scratch']
  #allocation2 [shape = 'f32[2,16,1]{2,1,0:T(8,128)}', space=vmem, size = 0x4000, scoped, tag = 'scratch operand']
  #allocation3 [shape = 'f32[2,16,17]{2,1,0:T(8,128)}', space=vmem, size = 0x4000, scoped, tag = 'scratch operand']
  #allocation4 [shape = 's32[1]{0}', space=sflag, size = 0x4, scoped, tag = 'scoped memory for gat_forward.5']
  #allocation5 [shape = 's32[1,1]{1,0:T(1,128)S(6)}', space=smem, size = 0x200, scoped, tag = 'prefetched SMEM operand 0']
  #allocation6 [shape = 's32[1]{0:T(128)S(6)}', space=smem, size = 0x200, scoped, tag = 'prefetched SMEM operand 1']
  %s0 = inlined_call_operand.<no memory space> [shape: s32[1,1], index: 0, kind: input, shape index: {}]
  %s1 = inlined_call_operand.<no memory space> [shape: s32[1], index: 1, kind: input, shape index: {}]
  %s2 = inlined_call_operand.vmem [shape: f32[16,2], index: 2, kind: input, shape index: {}]
  %s3 = inlined_call_operand.vmem [shape: f32[2,16], index: 3, kind: input, shape index: {}]
  %s4 = inlined_call_operand.vmem [shape: bf16[16,34], index: 4, kind: input, shape index: {}]
  %s5 = inlined_call_operand.vmem [shape: s8[16,16], index: 5, kind: input, shape index: {}]
  %s6 = inlined_call_operand.vmem [shape: bf16[16,32], index: 6, kind: output, shape index: {}]
  %s7 = sld [smem:[#allocation0]]
  $region38: #{gat_forward.5} parent=0
    _
  %s9 = ssub.s32 1, %s7
  %s10 = scalar_select 0, %s9, %s7
  %11 = sst [smem:[#allocation5]] %s0
  %12 = sst [smem:[#allocation6]] %s1
  // Predicated region
  $region2: #{gat_forward.5} parent=0 // pred_check
    _
  $region3: #{gat_forward.5} parent=0 // pred_check_branch
    %14 = sbr.rel (0) target = $region5
  $region4: #{gat_forward.5} parent=0 // pred_region
    _
  $region5: #{gat_forward.5} parent=0 // pred_fallthru
    _
  // Predicated region
  $region6: #{gat_forward.5} parent=0 // pred_check
    _
  $region7: #{gat_forward.5} parent=0 // pred_check_branch
    %16 = sbr.rel (0) target = $region9
  $region8: #{gat_forward.5} parent=0 // pred_region
    %s17 = sadd.s32 0, 0
    %s18 = smul.u32 %s17, 128
    %s19 = sadd.s32 %s18, 0
    %s20 = sld [smem:[#allocation5 + %s19]]
    %p21 = scmp.lt.s32.totalorder %s20, 0
    %s22 = scalar_select %p21, %s20, 0
    %s23 = smul.addr %s22, 2
    %s24 = scalar_lea.vmem %s3, %s23
    %s25 = sadd.s32 0, 0
    %s26 = smul.u32 %s25, 128
    %s27 = sadd.s32 %s26, 0
    %s28 = sld [smem:[#allocation5 + %s27]]
  $region9: #{gat_forward.5} parent=0 // pred_fallthru
    _
  // Predicated region
  $region10: #{gat_forward.5} parent=0 // pred_check
    _
  $region11: #{gat_forward.5} parent=0 // pred_check_branch
    %30 = sbr.rel (0) target = $region13
  $region12: #{gat_forward.5} parent=0 // pred_region
    %s31 = sadd.s32 0, 0
    %s32 = smul.u32 %s31, 128
    %s33 = sadd.s32 %s32, 0
    %s34 = sld [smem:[#allocation5 + %s33]]
    %s35 = smul.u32 2, %s34
    %p36 = scmp.lt.s32.totalorder %s35, 1
    %s37 = scalar_select %p36, %s35, 1
    %s38 = smul.addr %s37, 4
    %s39 = scalar_lea.vmem %s4, %s38
    %s40 = sadd.s32 0, 0
    %s41 = smul.u32 %s40, 128
    %s42 = sadd.s32 %s41, 0
    %s43 = sld [smem:[#allocation5 + %s42]]
    %s44 = smul.u32 2, %s43
  $region13: #{gat_forward.5} parent=0 // pred_fallthru
    _
  // Predicated region
  $region14: #{gat_forward.5} parent=0 // pred_check
    _
  $region15: #{gat_forward.5} parent=0 // pred_check_branch
    %46 = sbr.rel (0) target = $region17
  $region16: #{gat_forward.5} parent=0 // pred_region
    %s47 = sadd.s32 0, 0
    %s48 = smul.u32 %s47, 128
    %s49 = sadd.s32 %s48, 0
    %s50 = sld [smem:[#allocation5 + %s49]]
    %p51 = scmp.lt.s32.totalorder %s50, 0
    %s52 = scalar_select %p51, %s50, 0
    %s53 = smul.addr %s52, 2
    %s54 = scalar_lea.vmem %s5, %s53
    %s55 = sadd.s32 0, 0
    %s56 = smul.u32 %s55, 128
    %s57 = sadd.s32 %s56, 0
    %s58 = sld [smem:[#allocation5 + %s57]]
  $region17: #{gat_forward.5} parent=0 // pred_fallthru
    _
  %s59 = sadd.s32 0, 0
  %s60 = smul.u32 %s59, 128
  %s61 = sadd.s32 %s60, 0
  %s62 = sld [smem:[#allocation5 + %s61]]
  %p63 = scmp.lt.s32.totalorder %s62, 0
  %s64 = scalar_select %p63, %s62, 0
  %s65 = smul.addr %s64, 2
  %s66 = scalar_lea.vmem %s3, %s65
  %s67 = sadd.s32 0, 0
  %s68 = smul.u32 %s67, 128
  %s69 = sadd.s32 %s68, 0
  %s70 = sld [smem:[#allocation5 + %s69]]
  %s71 = smul.u32 2, %s70
  %p72 = scmp.lt.s32.totalorder %s71, 1
  %s73 = scalar_select %p72, %s71, 1
  %s74 = smul.addr %s73, 4
  %s75 = scalar_lea.vmem %s4, %s74
  %s76 = sadd.s32 0, 0
  %s77 = smul.u32 %s76, 128
  %s78 = sadd.s32 %s77, 0
  %s79 = sld [smem:[#allocation5 + %s78]]
  %p80 = scmp.lt.s32.totalorder %s79, 0
  %s81 = scalar_select %p80, %s79, 0
  %s82 = smul.addr %s81, 2
  %s83 = scalar_lea.vmem %s5, %s82
  %s84 = sadd.s32 0, 0
  %s85 = smul.u32 %s84, 128
  %s86 = sadd.s32 %s85, 0
  %s87 = sld [smem:[#allocation5 + %s86]]
  %p88 = scmp.lt.s32.totalorder %s87, 0
  %s89 = scalar_select %p88, %s87, 0
  %s90 = smul.addr %s89, 2
  %s91 = scalar_lea.vmem %s3, %s90
  %s92 = sadd.s32 0, 0
  %s93 = smul.u32 %s92, 128
  %s94 = sadd.s32 %s93, 0
  %s95 = sld [smem:[#allocation5 + %s94]]
  %s96 = sadd.s32 0, 0
  %s97 = smul.u32 %s96, 128
  %s98 = sadd.s32 %s97, 0
  %s99 = sld [smem:[#allocation5 + %s98]]
  %s100 = smul.u32 2, %s99
  %p101 = scmp.lt.s32.totalorder %s100, 1
  %s102 = scalar_select %p101, %s100, 1
  %s103 = smul.addr %s102, 4
  %s104 = scalar_lea.vmem %s4, %s103
  %s105 = sadd.s32 0, 0
  %s106 = smul.u32 %s105, 128
  %s107 = sadd.s32 %s106, 0
  %s108 = sld [smem:[#allocation5 + %s107]]
  %s109 = smul.u32 2, %s108
  %s110 = sadd.s32 0, 0
  %s111 = smul.u32 %s110, 128
  %s112 = sadd.s32 %s111, 0
  %s113 = sld [smem:[#allocation5 + %s112]]
  %p114 = scmp.lt.s32.totalorder %s113, 0
  %s115 = scalar_select %p114, %s113, 0
  %s116 = smul.addr %s115, 2
  %s117 = scalar_lea.vmem %s5, %s116
  %s118 = sadd.s32 0, 0
  %s119 = smul.u32 %s118, 128
  %s120 = sadd.s32 %s119, 0
  %s121 = sld [smem:[#allocation5 + %s120]]
  %p123 = scmp.eq.s32.totalorder 0, 0
  // Predicated region
  $region18: #{gat_forward.5} parent=0 // pred_check
    %p124 = pneg %p123
  $region19: #{gat_forward.5} parent=0 // pred_check_branch
    %126 = sbr.rel (%p124) target = $region21
  $region20: #{gat_forward.5} parent=0 // pred_region
    %vm127 = vcmask 7168
    %128 = vst.msk [vmem:[#allocation2] sm:$0xff] %vm127, -1e+30
    %129 = vst.msk [vmem:[#allocation2 + $0x8] sm:$0xff] %vm127, -1e+30
    %130 = vst.msk [vmem:[#allocation2 + $0x10] sm:$0xff] %vm127, -1e+30
    %131 = vst.msk [vmem:[#allocation2 + $0x18] sm:$0xff] %vm127, -1e+30
    %vm132 = vcmask 138240
    %133 = vst.msk [vmem:[#allocation3] sm:$0xff] %vm132, 0.0
    %134 = vst.msk [vmem:[#allocation3 + $0x8] sm:$0xff] %vm132, 0.0
    %135 = vst.msk [vmem:[#allocation3 + $0x10] sm:$0xff] %vm132, 0.0
    %136 = vst.msk [vmem:[#allocation3 + $0x18] sm:$0xff] %vm132, 0.0
  $region21: #{gat_forward.5} parent=0 // pred_fallthru
    _
  %s137 = sld [smem:[#allocation6]]
  %p138 = scmp.lt.s32.totalorder 0, %s137
  // Predicated region
  $region22: #{gat_forward.5} parent=0 // pred_check
    %p139 = pneg %p138
  $region23: #{gat_forward.5} parent=0 // pred_check_branch
    %141 = sbr.rel (%p139) target = $region25
  $region24: #{gat_forward.5} parent=0 // pred_region
    %v142 = vld [vmem:[%s117] sm:$0x3]
    %v143 = vld [vmem:[%s117 + $0x2] sm:$0x3]
    %v144 = vunpack.c.0.s8 %v142
    %v145 = vunpack.c.0.s8 %v143
    %v146 = vcvt.s32.f32 %v144
    %v147 = vcvt.s32.f32 %v145
    %vm148 = vcmp.gt.f32.partialorder %v146, 0.5
    %vm149 = vcmp.gt.f32.partialorder %v147, 0.5
    %v150 = vsel %vm148, 0.0, -1e+30
    %v151 = vsel %vm149, 0.0, -1e+30
    %v152 = vld [vmem:[%s104] sm:$0xf]
    %v153 = vld [vmem:[%s104 + $0x4] sm:$0xf]
    %v154 = vld [vmem:[%s2] sm:$0xff]
    %v155 = vld [vmem:[%s2 + $0x8] sm:$0xff]
    %v156 = vld [vmem:[%s91] sm:$0x3]
    %158 = vset.pattern.permute.xlu0 0
    %159 = vperm.xlu0 %158, %v154
    %v160 = vpop.permute.xlu0 %159
    %163 = vset.pattern.permute.xlu0 0
    %164 = vperm.xlu0 %163, %v155
    %v165 = vpop.permute.xlu0 %164
    %v167 = vlaneseq
    %v168 = vshrl.u32 %v167, 7
    %v169 = vsub.s32 0, %v168
    %v170 = vrot.slane %v156, %v169
    %v171 = vadd.f32 %v160, %v170
    %v172 = vadd.f32 %v165, %v170
    %vm173 = vcmp.gt.f32.partialorder %v171, 0.0
    %vm174 = vcmp.gt.f32.partialorder %v172, 0.0
    %v175 = vmul.f32 %v171, 0.01
    %v176 = vmul.f32 %v172, 0.01
    %v177 = vsel %vm173, %v171, %v175
    %v178 = vsel %vm174, %v172, %v176
    %v179 = vadd.f32 %v177, %v150
    %v180 = vadd.f32 %v178, %v151
    %v181 = vld [vmem:[#allocation2] sm:$0xff]
    %v182 = vld [vmem:[#allocation2 + $0x8] sm:$0xff]
    %vm183 = vcmask 130048
    %v184 = vsel %vm183, %v179, -inf
    %185 = vmax.xlane.f32.xlu0 %v184
    %v186 = vpop.xlane.xlu0 %185
    %v187 = vsel %vm183, %v180, -inf
    %188 = vmax.xlane.f32.xlu0 %v187
    %v189 = vpop.xlane.xlu0 %188
    %v190 = vmax.f32 %v181, %v186
    %v191 = vmax.f32 %v182, %v189
    %v192 = vsub.f32 %v181, %v190
    %v193 = vsub.f32 %v182, %v191
    %v194 = vmul.f32 %v192, 1.442695
    %v195 = vpow.pop %v194
    %v196 = vmul.f32 %v193, 1.442695
    %v197 = vpow.pop %v196
    %199 = vset.pattern.permute.xlu0 0
    %200 = vperm.xlu0 %199, %v190
    %v201 = vpop.permute.xlu0 %200
    %204 = vset.pattern.permute.xlu0 0
    %205 = vperm.xlu0 %204, %v191
    %v206 = vpop.permute.xlu0 %205
    %v208 = vsub.f32 %v179, %v201
    %v209 = vsub.f32 %v180, %v206
    %v210 = vmul.f32 %v208, 1.442695
    %v211 = vpow.pop %v210
    %v212 = vmul.f32 %v209, 1.442695
    %v213 = vpow.pop %v212
    %v214 = vpack.c.bf16 %v213, %v211
    %v217 = vunpack.c.l.b16 %v152
    %v218 = vunpack.c.l.b16 %v153
    %v219 = vpack.c.b16 %v218, %v217
    %v222 = vsel %vm183, %v214, 0
    %224 = vmatprep.subr.bf16.mxu0 0
    %225 = vmatpush1.bf16.msra.mxu0 0
    %226 = vmatprep.subr.bf16.mxu0 0
    %227 = vmatpush1.bf16.msra.mxu0 0
    %228 = vmatprep.subr.bf16.mxu0 0
    %229 = vmatpush1.bf16.msra.mxu0 0
    %230 = vmatprep.subr.bf16.mxu0 0
    %231 = vmatpush1.bf16.msra.mxu0 0
    %232 = vmatprep.subr.bf16.mxu0 0
    %233 = vmatpush1.bf16.msra.mxu0 0
    %234 = vmatprep.subr.bf16.mxu0 0
    %235 = vmatpush1.bf16.msra.mxu0 0
    %236 = vmatprep.subr.bf16.mxu0 0
    %237 = vmatpush1.bf16.msra.mxu0 0
    %238 = vmatprep.subr.bf16.mxu0 0
    %239 = vmatpush1.bf16.msra.mxu0 %v219
    %240 = vmatprep.subr.bf16.mxu0 0
    %241 = vmatpush2.bf16.msra.mxu0 0
    %242 = vmatprep.subr.bf16.mxu0 0
    %243 = vmatpush2.bf16.msra.mxu0 0
    %244 = vmatprep.subr.bf16.mxu0 0
    %245 = vmatpush2.bf16.msra.mxu0 0
    %246 = vmatprep.subr.bf16.mxu0 0
    %247 = vmatpush2.bf16.msra.mxu0 0
    %248 = vmatprep.subr.bf16.mxu0 0
    %249 = vmatpush2.bf16.msra.mxu0 0
    %250 = vmatprep.subr.bf16.mxu0 0
    %251 = vmatpush2.bf16.msra.mxu0 0
    %252 = vmatprep.subr.bf16.mxu0 0
    %253 = vmatpush2.bf16.msra.mxu0 0
    %254 = vmatprep.subr.bf16.mxu0 0
    %255 = vmatpush2.bf16.msra.mxu0 0
    %256 = vmatprep.mubr.bf16.mxu0 0
    %257 = vmatmul.mubr.bf16.gmra.mxu0 %v222
    %v258 = vpop.f32.mrf.mxu0
    %v259 = vadd.f32 0.0, %v258
    %v260 = vpop.f32.mrf.mxu0
    %v261 = vpop.f32.mrf.mxu0
    %v262 = vadd.f32 0.0, %v261
    %v263 = vpop.f32.mrf.mxu0
    %264 = vdwg.mxu0
    %v265 = vld [vmem:[#allocation3] sm:$0xff]
    %v266 = vld [vmem:[#allocation3 + $0x8] sm:$0xff]
    %268 = vset.pattern.permute.xlu0 0
    %269 = vperm.xlu0 %268, %v195
    %v270 = vpop.permute.xlu0 %269
    %273 = vset.pattern.permute.xlu0 0
    %274 = vperm.xlu0 %273, %v197
    %v275 = vpop.permute.xlu0 %274
    %v277 = vmul.f32 %v270, %v265
    %v278 = vmul.f32 %v275, %v266
    %v279 = vadd.f32 %v277, %v259
    %v280 = vadd.f32 %v278, %v262
    %vm281 = vcmask 138240
    %282 = vst.msk [vmem:[#allocation3] sm:$0xff] %vm281, %v279
    %283 = vst.msk [vmem:[#allocation3 + $0x8] sm:$0xff] %vm281, %v280
    %vm284 = vcmask 7168
    %285 = vst.msk [vmem:[#allocation2] sm:$0xff] %vm284, %v190
    %286 = vst.msk [vmem:[#allocation2 + $0x8] sm:$0xff] %vm284, %v191
    %287 = vset.pattern.permute.xlu0 1
    %288 = vperm.xlu0 %287, %v154
    %v289 = vpop.permute.xlu0 %288
    %291 = vset.pattern.permute.xlu0 1
    %292 = vperm.xlu0 %291, %v155
    %v293 = vpop.permute.xlu0 %292
    %v295 = vlaneseq
    %v296 = vshrl.u32 %v295, 7
    %v297 = vsub.s32 1, %v296
    %v298 = vrot.slane %v156, %v297
    %v299 = vadd.f32 %v289, %v298
    %v300 = vadd.f32 %v293, %v298
    %vm301 = vcmp.gt.f32.partialorder %v299, 0.0
    %vm302 = vcmp.gt.f32.partialorder %v300, 0.0
    %v303 = vmul.f32 %v299, 0.01
    %v304 = vmul.f32 %v300, 0.01
    %v305 = vsel %vm301, %v299, %v303
    %v306 = vsel %vm302, %v300, %v304
    %v307 = vadd.f32 %v305, %v150
    %v308 = vadd.f32 %v306, %v151
    %s309 = scalar_lea.vmem [#allocation2], 16
    %v310 = vld [vmem:[%s309] sm:$0xff]
    %v311 = vld [vmem:[%s309 + $0x8] sm:$0xff]
    %v312 = vsel %vm183, %v307, -inf
    %313 = vmax.xlane.f32.xlu0 %v312
    %v314 = vpop.xlane.xlu0 %313
    %v315 = vsel %vm183, %v308, -inf
    %316 = vmax.xlane.f32.xlu0 %v315
    %v317 = vpop.xlane.xlu0 %316
    %v318 = vmax.f32 %v310, %v314
    %v319 = vmax.f32 %v311, %v317
    %v320 = vsub.f32 %v310, %v318
    %v321 = vsub.f32 %v311, %v319
    %v322 = vmul.f32 %v320, 1.442695
    %v323 = vpow.pop %v322
    %v324 = vmul.f32 %v321, 1.442695
    %v325 = vpow.pop %v324
    %327 = vset.pattern.permute.xlu0 0
    %328 = vperm.xlu0 %327, %v318
    %v329 = vpop.permute.xlu0 %328
    %332 = vset.pattern.permute.xlu0 0
    %333 = vperm.xlu0 %332, %v319
    %v334 = vpop.permute.xlu0 %333
    %v336 = vsub.f32 %v307, %v329
    %v337 = vsub.f32 %v308, %v334
    %v338 = vmul.f32 %v336, 1.442695
    %v339 = vpow.pop %v338
    %v340 = vmul.f32 %v337, 1.442695
    %v341 = vpow.pop %v340
    %v342 = vpack.c.bf16 %v341, %v339
    %343 = vrot.lane.b32.xlu0 %v219, 111
    %v344 = vpop.permute.xlu0 %343
    %v347 = vsel %vm183, %v342, 0
    %349 = vmatprep.subr.bf16.mxu0 0
    %350 = vmatpush1.bf16.msra.mxu0 0
    %351 = vmatprep.subr.bf16.mxu0 0
    %352 = vmatpush1.bf16.msra.mxu0 0
    %353 = vmatprep.subr.bf16.mxu0 0
    %354 = vmatpush1.bf16.msra.mxu0 0
    %355 = vmatprep.subr.bf16.mxu0 0
    %356 = vmatpush1.bf16.msra.mxu0 0
    %357 = vmatprep.subr.bf16.mxu0 0
    %358 = vmatpush1.bf16.msra.mxu0 0
    %359 = vmatprep.subr.bf16.mxu0 0
    %360 = vmatpush1.bf16.msra.mxu0 0
    %361 = vmatprep.subr.bf16.mxu0 0
    %362 = vmatpush1.bf16.msra.mxu0 0
    %363 = vmatprep.subr.bf16.mxu0 0
    %364 = vmatpush1.bf16.msra.mxu0 %v344
    %365 = vmatprep.subr.bf16.mxu0 0
    %366 = vmatpush2.bf16.msra.mxu0 0
    %367 = vmatprep.subr.bf16.mxu0 0
    %368 = vmatpush2.bf16.msra.mxu0 0
    %369 = vmatprep.subr.bf16.mxu0 0
    %370 = vmatpush2.bf16.msra.mxu0 0
    %371 = vmatprep.subr.bf16.mxu0 0
    %372 = vmatpush2.bf16.msra.mxu0 0
    %373 = vmatprep.subr.bf16.mxu0 0
    %374 = vmatpush2.bf16.msra.mxu0 0
    %375 = vmatprep.subr.bf16.mxu0 0
    %376 = vmatpush2.bf16.msra.mxu0 0
    %377 = vmatprep.subr.bf16.mxu0 0
    %378 = vmatpush2.bf16.msra.mxu0 0
    %379 = vmatprep.subr.bf16.mxu0 0
    %380 = vmatpush2.bf16.msra.mxu0 0
    %381 = vmatprep.mubr.bf16.mxu0 0
    %382 = vmatmul.mubr.bf16.gmra.mxu0 %v347
    %v383 = vpop.f32.mrf.mxu0
    %v384 = vadd.f32 0.0, %v383
    %v385 = vpop.f32.mrf.mxu0
    %v386 = vpop.f32.mrf.mxu0
    %v387 = vadd.f32 0.0, %v386
    %v388 = vpop.f32.mrf.mxu0
    %389 = vdwg.mxu0
    %s390 = scalar_lea.vmem [#allocation3], 16
    %v391 = vld [vmem:[%s390] sm:$0xff]
    %v392 = vld [vmem:[%s390 + $0x8] sm:$0xff]
    %394 = vset.pattern.permute.xlu0 0
    %395 = vperm.xlu0 %394, %v323
    %v396 = vpop.permute.xlu0 %395
    %399 = vset.pattern.permute.xlu0 0
    %400 = vperm.xlu0 %399, %v325
    %v401 = vpop.permute.xlu0 %400
    %v403 = vmul.f32 %v396, %v391
    %v404 = vmul.f32 %v401, %v392
    %v405 = vadd.f32 %v403, %v384
    %v406 = vadd.f32 %v404, %v387
    %407 = vst.msk [vmem:[%s390] sm:$0xff] %vm281, %v405
    %408 = vst.msk [vmem:[%s390 + $0x8] sm:$0xff] %vm281, %v406
    %409 = vst.msk [vmem:[%s309] sm:$0xff] %vm284, %v318
    %410 = vst.msk [vmem:[%s309 + $0x8] sm:$0xff] %vm284, %v319
  $region25: #{gat_forward.5} parent=0 // pred_fallthru
    _
  // Predicated region
  $region26: #{gat_forward.5} parent=0 // pred_check
    %p411 = pneg %p123
  $region27: #{gat_forward.5} parent=0 // pred_check_branch
    %413 = sbr.rel (%p411) target = $region29
  $region28: #{gat_forward.5} parent=0 // pred_region
    %v414 = vld [vmem:[#allocation3] sm:$0xff]
    %v415 = vld [vmem:[#allocation3 + $0x8] sm:$0xff]
    %v416 = vmax.f32 %v414, 1e-30
    %v417 = vmax.f32 %v415, 1e-30
    %v418 = vrcp.pop %v416
    %v419 = vrcp.pop %v417
    %421 = vset.pattern.permute.xlu0 16
    %422 = vperm.xlu0 %421, %v418
    %v423 = vpop.permute.xlu0 %422
    %426 = vset.pattern.permute.xlu0 16
    %427 = vperm.xlu0 %426, %v419
    %v428 = vpop.permute.xlu0 %427
    %v430 = vmul.f32 %v414, %v423
    %v431 = vmul.f32 %v415, %v428
    %v432 = vld [vmem:[#allocation2] sm:$0xff]
    %v433 = vld [vmem:[#allocation2 + $0x8] sm:$0xff]
    %vm434 = vcmp.gt.f32.partialorder %v432, -1e+29
    %vm435 = vcmp.gt.f32.partialorder %v433, -1e+29
    %v436 = vsel %vm434, 1, 0
    %v437 = vsel %vm435, 1, 0
    %438 = vset.pattern.permute.xlu0 0
    %439 = vperm.xlu0 %438, %v436
    %v440 = vpop.permute.xlu0 %439
    %441 = vset.pattern.permute.xlu0 0
    %442 = vperm.xlu0 %441, %v437
    %v443 = vpop.permute.xlu0 %442
    %vm444 = vcmp.eq.s32.totalorder %v440, 1
    %vm445 = vcmp.eq.s32.totalorder %v443, 1
    %v446 = vsel %vm444, %v430, 0.0
    %v447 = vsel %vm445, %v431, 0.0
    %vm448 = vcmp.gt.f32.partialorder %v446, 0.0
    %vm449 = vcmp.gt.f32.partialorder %v447, 0.0
    %v450 = vmin.f32 %v446, 0.0
    %v451 = vmin.f32 %v447, 0.0
    %v452 = vmul.f32 %v450, 1.442695
    %v453 = vpow.pop %v452
    %v454 = vmul.f32 %v451, 1.442695
    %v455 = vpow.pop %v454
    %v456 = vsub.f32 %v453, 1.0
    %v457 = vsub.f32 %v455, 1.0
    %v458 = vsel %vm448, %v446, %v456
    %v459 = vsel %vm449, %v447, %v457
    %s460 = scalar_lea.vmem [#allocation3], 16
    %v461 = vld [vmem:[%s460] sm:$0xff]
    %v462 = vld [vmem:[%s460 + $0x8] sm:$0xff]
    %v463 = vmax.f32 %v461, 1e-30
    %v464 = vmax.f32 %v462, 1e-30
    %v465 = vrcp.pop %v463
    %v466 = vrcp.pop %v464
    %468 = vset.pattern.permute.xlu0 16
    %469 = vperm.xlu0 %468, %v465
    %v470 = vpop.permute.xlu0 %469
    %473 = vset.pattern.permute.xlu0 16
    %474 = vperm.xlu0 %473, %v466
    %v475 = vpop.permute.xlu0 %474
    %v477 = vmul.f32 %v461, %v470
    %v478 = vmul.f32 %v462, %v475
    %s479 = scalar_lea.vmem [#allocation2], 16
    %v480 = vld [vmem:[%s479] sm:$0xff]
    %v481 = vld [vmem:[%s479 + $0x8] sm:$0xff]
    %vm482 = vcmp.gt.f32.partialorder %v480, -1e+29
    %vm483 = vcmp.gt.f32.partialorder %v481, -1e+29
    %v484 = vsel %vm482, 1, 0
    %v485 = vsel %vm483, 1, 0
    %486 = vset.pattern.permute.xlu0 0
    %487 = vperm.xlu0 %486, %v484
    %v488 = vpop.permute.xlu0 %487
    %489 = vset.pattern.permute.xlu0 0
    %490 = vperm.xlu0 %489, %v485
    %v491 = vpop.permute.xlu0 %490
    %vm492 = vcmp.eq.s32.totalorder %v488, 1
    %vm493 = vcmp.eq.s32.totalorder %v491, 1
    %v494 = vsel %vm492, %v477, 0.0
    %v495 = vsel %vm493, %v478, 0.0
    %vm496 = vcmp.gt.f32.partialorder %v494, 0.0
    %vm497 = vcmp.gt.f32.partialorder %v495, 0.0
    %v498 = vmin.f32 %v494, 0.0
    %v499 = vmin.f32 %v495, 0.0
    %v500 = vmul.f32 %v498, 1.442695
    %v501 = vpow.pop %v500
    %v502 = vmul.f32 %v499, 1.442695
    %v503 = vpow.pop %v502
    %v504 = vsub.f32 %v501, 1.0
    %v505 = vsub.f32 %v503, 1.0
    %v506 = vsel %vm496, %v494, %v504
    %v507 = vsel %vm497, %v495, %v505
    %510 = vrot.lane.b32.xlu0 %v506, 16
    %v511 = vpop.permute.xlu0 %510
    %512 = vrot.lane.b32.xlu0 %v507, 16
    %v513 = vpop.permute.xlu0 %512
    %vm516 = vcmask 130048
    %v517 = vsel %vm516, %v458, %v511
    %v518 = vsel %vm516, %v459, %v513
    %v519 = vpack.c.bf16 %v518, %v517
    %v521 = vunpack.c.l.b16 %v519
    %v522 = vunpack.c.h.b16 %v519
    %v523 = vpack.c.b16 %v521, %v521
    %v524 = vpack.c.b16 %v522, %v522
    %vm527 = vcmask 257024
    %528 = vst.msk [vmem:[%s6] sm:$0xf] %vm527, %v523
    %529 = vst.msk [vmem:[%s6 + $0x4] sm:$0xf] %vm527, %v524
  $region29: #{gat_forward.5} parent=0 // pred_fallthru
    _
  // Predicated region
  $region30: #{gat_forward.5} parent=0 // pred_check
    _
  $region31: #{gat_forward.5} parent=0 // pred_check_branch
    %531 = sbr.rel (0) target = $region33
  $region32: #{gat_forward.5} parent=0 // pred_region
    _
  $region33: #{gat_forward.5} parent=0 // pred_fallthru
    _
  // Predicated region
  $region34: #{gat_forward.5} parent=0 // pred_check
    _
  $region35: #{gat_forward.5} parent=0 // pred_check_branch
    %533 = sbr.rel (0) target = $region37
  $region36: #{gat_forward.5} parent=0 // pred_region
    _
  $region37: #{gat_forward.5} parent=0 // pred_fallthru
    _

// kernel: gat_forward.7
$region0: #{gat_forward.7}
  #allocation0 [shape = 'u32[]', space=smem, size = 0x4, offset = 0x4, fixed_abs, tag = 'smem constant byte address 0x4 - core index']
  #allocation1 [shape = 'u32[144,128]{1,0:T(1,128)}', space=vmem, size = 0x12000, scoped, tag = 'internal scratch']
  #allocation2 [shape = 'f32[2,16,1]{2,1,0:T(8,128)}', space=vmem, size = 0x4000, scoped, tag = 'scratch operand']
  #allocation3 [shape = 'f32[2,16,9]{2,1,0:T(8,128)}', space=vmem, size = 0x4000, scoped, tag = 'scratch operand']
  #allocation4 [shape = 's32[1]{0}', space=sflag, size = 0x4, scoped, tag = 'scoped memory for gat_forward.7']
  #allocation5 [shape = 's32[1,1]{1,0:T(1,128)S(6)}', space=smem, size = 0x200, scoped, tag = 'prefetched SMEM operand 0']
  #allocation6 [shape = 's32[1]{0:T(128)S(6)}', space=smem, size = 0x200, scoped, tag = 'prefetched SMEM operand 1']
  %s0 = inlined_call_operand.<no memory space> [shape: s32[1,1], index: 0, kind: input, shape index: {}]
  %s1 = inlined_call_operand.<no memory space> [shape: s32[1], index: 1, kind: input, shape index: {}]
  %s2 = inlined_call_operand.vmem [shape: f32[16,2], index: 2, kind: input, shape index: {}]
  %s3 = inlined_call_operand.vmem [shape: f32[2,16], index: 3, kind: input, shape index: {}]
  %s4 = inlined_call_operand.vmem [shape: bf16[16,18], index: 4, kind: input, shape index: {}]
  %s5 = inlined_call_operand.vmem [shape: s8[16,16], index: 5, kind: input, shape index: {}]
  %s6 = inlined_call_operand.hbm [shape: f32[16,16], index: 6, kind: output, shape index: {}]
  %s7 = sld [smem:[#allocation0]]
  $region38: #{gat_forward.7} parent=0
    _
  %s9 = ssub.s32 1, %s7
  %s10 = scalar_select 0, %s9, %s7
  %11 = sst [smem:[#allocation5]] %s0
  %12 = sst [smem:[#allocation6]] %s1
  $region1: #{gat_forward.7} parent=0
    #allocation7 [shape = 'u8[8192]{0}', space=vmem, size = 0x2000, scoped, tag = 'output window, operand 0, single buffered']
    #allocation8 [shape = 's32[1]{0}', space=sflag, size = 0x4, scoped, tag = 'scoped memory for gat_forward.7']
    %13 = vsyncpa [#allocation8], 0
    // Predicated region
    $region2: #{gat_forward.7} parent=1 // pred_check
      _
    $region3: #{gat_forward.7} parent=1 // pred_check_branch
      %15 = sbr.rel (0) target = $region5
    $region4: #{gat_forward.7} parent=1 // pred_region
      _
    $region5: #{gat_forward.7} parent=1 // pred_fallthru
      _
    // Predicated region
    $region6: #{gat_forward.7} parent=1 // pred_check
      _
    $region7: #{gat_forward.7} parent=1 // pred_check_branch
      %17 = sbr.rel (0) target = $region9
    $region8: #{gat_forward.7} parent=1 // pred_region
      %s18 = sadd.s32 0, 0
      %s19 = smul.u32 %s18, 128
      %s20 = sadd.s32 %s19, 0
      %s21 = sld [smem:[#allocation5 + %s20]]
      %p22 = scmp.lt.s32.totalorder %s21, 0
      %s23 = scalar_select %p22, %s21, 0
      %s24 = smul.addr %s23, 2
      %s25 = scalar_lea.vmem %s3, %s24
      %s26 = sadd.s32 0, 0
      %s27 = smul.u32 %s26, 128
      %s28 = sadd.s32 %s27, 0
      %s29 = sld [smem:[#allocation5 + %s28]]
    $region9: #{gat_forward.7} parent=1 // pred_fallthru
      _
    // Predicated region
    $region10: #{gat_forward.7} parent=1 // pred_check
      _
    $region11: #{gat_forward.7} parent=1 // pred_check_branch
      %31 = sbr.rel (0) target = $region13
    $region12: #{gat_forward.7} parent=1 // pred_region
      %s32 = sadd.s32 0, 0
      %s33 = smul.u32 %s32, 128
      %s34 = sadd.s32 %s33, 0
      %s35 = sld [smem:[#allocation5 + %s34]]
      %s36 = smul.u32 2, %s35
      %p37 = scmp.lt.s32.totalorder %s36, 1
      %s38 = scalar_select %p37, %s36, 1
      %s39 = smul.addr %s38, 4
      %s40 = scalar_lea.vmem %s4, %s39
      %s41 = sadd.s32 0, 0
      %s42 = smul.u32 %s41, 128
      %s43 = sadd.s32 %s42, 0
      %s44 = sld [smem:[#allocation5 + %s43]]
      %s45 = smul.u32 2, %s44
    $region13: #{gat_forward.7} parent=1 // pred_fallthru
      _
    // Predicated region
    $region14: #{gat_forward.7} parent=1 // pred_check
      _
    $region15: #{gat_forward.7} parent=1 // pred_check_branch
      %47 = sbr.rel (0) target = $region17
    $region16: #{gat_forward.7} parent=1 // pred_region
      %s48 = sadd.s32 0, 0
      %s49 = smul.u32 %s48, 128
      %s50 = sadd.s32 %s49, 0
      %s51 = sld [smem:[#allocation5 + %s50]]
      %p52 = scmp.lt.s32.totalorder %s51, 0
      %s53 = scalar_select %p52, %s51, 0
      %s54 = smul.addr %s53, 2
      %s55 = scalar_lea.vmem %s5, %s54
      %s56 = sadd.s32 0, 0
      %s57 = smul.u32 %s56, 128
      %s58 = sadd.s32 %s57, 0
      %s59 = sld [smem:[#allocation5 + %s58]]
    $region17: #{gat_forward.7} parent=1 // pred_fallthru
      _
    %s60 = sadd.s32 0, 0
    %s61 = smul.u32 %s60, 128
    %s62 = sadd.s32 %s61, 0
    %s63 = sld [smem:[#allocation5 + %s62]]
    %p64 = scmp.lt.s32.totalorder %s63, 0
    %s65 = scalar_select %p64, %s63, 0
    %s66 = smul.addr %s65, 2
    %s67 = scalar_lea.vmem %s3, %s66
    %s68 = sadd.s32 0, 0
    %s69 = smul.u32 %s68, 128
    %s70 = sadd.s32 %s69, 0
    %s71 = sld [smem:[#allocation5 + %s70]]
    %s72 = smul.u32 2, %s71
    %p73 = scmp.lt.s32.totalorder %s72, 1
    %s74 = scalar_select %p73, %s72, 1
    %s75 = smul.addr %s74, 4
    %s76 = scalar_lea.vmem %s4, %s75
    %s77 = sadd.s32 0, 0
    %s78 = smul.u32 %s77, 128
    %s79 = sadd.s32 %s78, 0
    %s80 = sld [smem:[#allocation5 + %s79]]
    %p81 = scmp.lt.s32.totalorder %s80, 0
    %s82 = scalar_select %p81, %s80, 0
    %s83 = smul.addr %s82, 2
    %s84 = scalar_lea.vmem %s5, %s83
    %s85 = sadd.s32 0, 0
    %s86 = smul.u32 %s85, 128
    %s87 = sadd.s32 %s86, 0
    %s88 = sld [smem:[#allocation5 + %s87]]
    %p89 = scmp.lt.s32.totalorder %s88, 0
    %s90 = scalar_select %p89, %s88, 0
    %s91 = smul.addr %s90, 2
    %s92 = scalar_lea.vmem %s3, %s91
    %s93 = sadd.s32 0, 0
    %s94 = smul.u32 %s93, 128
    %s95 = sadd.s32 %s94, 0
    %s96 = sld [smem:[#allocation5 + %s95]]
    %s97 = sadd.s32 0, 0
    %s98 = smul.u32 %s97, 128
    %s99 = sadd.s32 %s98, 0
    %s100 = sld [smem:[#allocation5 + %s99]]
    %s101 = smul.u32 2, %s100
    %p102 = scmp.lt.s32.totalorder %s101, 1
    %s103 = scalar_select %p102, %s101, 1
    %s104 = smul.addr %s103, 4
    %s105 = scalar_lea.vmem %s4, %s104
    %s106 = sadd.s32 0, 0
    %s107 = smul.u32 %s106, 128
    %s108 = sadd.s32 %s107, 0
    %s109 = sld [smem:[#allocation5 + %s108]]
    %s110 = smul.u32 2, %s109
    %s111 = sadd.s32 0, 0
    %s112 = smul.u32 %s111, 128
    %s113 = sadd.s32 %s112, 0
    %s114 = sld [smem:[#allocation5 + %s113]]
    %p115 = scmp.lt.s32.totalorder %s114, 0
    %s116 = scalar_select %p115, %s114, 0
    %s117 = smul.addr %s116, 2
    %s118 = scalar_lea.vmem %s5, %s117
    %s119 = sadd.s32 0, 0
    %s120 = smul.u32 %s119, 128
    %s121 = sadd.s32 %s120, 0
    %s122 = sld [smem:[#allocation5 + %s121]]
    %p124 = scmp.eq.s32.totalorder 0, 0
    // Predicated region
    $region18: #{gat_forward.7} parent=1 // pred_check
      %p125 = pneg %p124
    $region19: #{gat_forward.7} parent=1 // pred_check_branch
      %127 = sbr.rel (%p125) target = $region21
    $region20: #{gat_forward.7} parent=1 // pred_region
      %vm128 = vcmask 7168
      %129 = vst.msk [vmem:[#allocation2] sm:$0xff] %vm128, -1e+30
      %130 = vst.msk [vmem:[#allocation2 + $0x8] sm:$0xff] %vm128, -1e+30
      %131 = vst.msk [vmem:[#allocation2 + $0x10] sm:$0xff] %vm128, -1e+30
      %132 = vst.msk [vmem:[#allocation2 + $0x18] sm:$0xff] %vm128, -1e+30
      %vm133 = vcmask 72704
      %134 = vst.msk [vmem:[#allocation3] sm:$0xff] %vm133, 0.0
      %135 = vst.msk [vmem:[#allocation3 + $0x8] sm:$0xff] %vm133, 0.0
      %136 = vst.msk [vmem:[#allocation3 + $0x10] sm:$0xff] %vm133, 0.0
      %137 = vst.msk [vmem:[#allocation3 + $0x18] sm:$0xff] %vm133, 0.0
    $region21: #{gat_forward.7} parent=1 // pred_fallthru
      _
    %s138 = sld [smem:[#allocation6]]
    %p139 = scmp.lt.s32.totalorder 0, %s138
    // Predicated region
    $region22: #{gat_forward.7} parent=1 // pred_check
      %p140 = pneg %p139
    $region23: #{gat_forward.7} parent=1 // pred_check_branch
      %142 = sbr.rel (%p140) target = $region25
    $region24: #{gat_forward.7} parent=1 // pred_region
      %v143 = vld [vmem:[%s118] sm:$0x3]
      %v144 = vld [vmem:[%s118 + $0x2] sm:$0x3]
      %v145 = vunpack.c.0.s8 %v143
      %v146 = vunpack.c.0.s8 %v144
      %v147 = vcvt.s32.f32 %v145
      %v148 = vcvt.s32.f32 %v146
      %vm149 = vcmp.gt.f32.partialorder %v147, 0.5
      %vm150 = vcmp.gt.f32.partialorder %v148, 0.5
      %v151 = vsel %vm149, 0.0, -1e+30
      %v152 = vsel %vm150, 0.0, -1e+30
      %v153 = vld [vmem:[%s105] sm:$0xf]
      %v154 = vld [vmem:[%s105 + $0x4] sm:$0xf]
      %v155 = vld [vmem:[%s2] sm:$0xff]
      %v156 = vld [vmem:[%s2 + $0x8] sm:$0xff]
      %v157 = vld [vmem:[%s92] sm:$0x3]
      %159 = vset.pattern.permute.xlu0 0
      %160 = vperm.xlu0 %159, %v155
      %v161 = vpop.permute.xlu0 %160
      %164 = vset.pattern.permute.xlu0 0
      %165 = vperm.xlu0 %164, %v156
      %v166 = vpop.permute.xlu0 %165
      %v168 = vlaneseq
      %v169 = vshrl.u32 %v168, 7
      %v170 = vsub.s32 0, %v169
      %v171 = vrot.slane %v157, %v170
      %v172 = vadd.f32 %v161, %v171
      %v173 = vadd.f32 %v166, %v171
      %vm174 = vcmp.gt.f32.partialorder %v172, 0.0
      %vm175 = vcmp.gt.f32.partialorder %v173, 0.0
      %v176 = vmul.f32 %v172, 0.01
      %v177 = vmul.f32 %v173, 0.01
      %v178 = vsel %vm174, %v172, %v176
      %v179 = vsel %vm175, %v173, %v177
      %v180 = vadd.f32 %v178, %v151
      %v181 = vadd.f32 %v179, %v152
      %v182 = vld [vmem:[#allocation2] sm:$0xff]
      %v183 = vld [vmem:[#allocation2 + $0x8] sm:$0xff]
      %vm184 = vcmask 130048
      %v185 = vsel %vm184, %v180, -inf
      %186 = vmax.xlane.f32.xlu0 %v185
      %v187 = vpop.xlane.xlu0 %186
      %v188 = vsel %vm184, %v181, -inf
      %189 = vmax.xlane.f32.xlu0 %v188
      %v190 = vpop.xlane.xlu0 %189
      %v191 = vmax.f32 %v182, %v187
      %v192 = vmax.f32 %v183, %v190
      %v193 = vsub.f32 %v182, %v191
      %v194 = vsub.f32 %v183, %v192
      %v195 = vmul.f32 %v193, 1.442695
      %v196 = vpow.pop %v195
      %v197 = vmul.f32 %v194, 1.442695
      %v198 = vpow.pop %v197
      %200 = vset.pattern.permute.xlu0 0
      %201 = vperm.xlu0 %200, %v191
      %v202 = vpop.permute.xlu0 %201
      %205 = vset.pattern.permute.xlu0 0
      %206 = vperm.xlu0 %205, %v192
      %v207 = vpop.permute.xlu0 %206
      %v209 = vsub.f32 %v180, %v202
      %v210 = vsub.f32 %v181, %v207
      %v211 = vmul.f32 %v209, 1.442695
      %v212 = vpow.pop %v211
      %v213 = vmul.f32 %v210, 1.442695
      %v214 = vpow.pop %v213
      %v215 = vpack.c.bf16 %v214, %v212
      %v218 = vunpack.c.l.b16 %v153
      %v219 = vunpack.c.l.b16 %v154
      %v220 = vpack.c.b16 %v219, %v218
      %v223 = vsel %vm184, %v215, 0
      %225 = vmatprep.subr.bf16.mxu0 0
      %226 = vmatpush1.bf16.msra.mxu0 0
      %227 = vmatprep.subr.bf16.mxu0 0
      %228 = vmatpush1.bf16.msra.mxu0 0
      %229 = vmatprep.subr.bf16.mxu0 0
      %230 = vmatpush1.bf16.msra.mxu0 0
      %231 = vmatprep.subr.bf16.mxu0 0
      %232 = vmatpush1.bf16.msra.mxu0 0
      %233 = vmatprep.subr.bf16.mxu0 0
      %234 = vmatpush1.bf16.msra.mxu0 0
      %235 = vmatprep.subr.bf16.mxu0 0
      %236 = vmatpush1.bf16.msra.mxu0 0
      %237 = vmatprep.subr.bf16.mxu0 0
      %238 = vmatpush1.bf16.msra.mxu0 0
      %239 = vmatprep.subr.bf16.mxu0 0
      %240 = vmatpush1.bf16.msra.mxu0 %v220
      %241 = vmatprep.subr.bf16.mxu0 0
      %242 = vmatpush2.bf16.msra.mxu0 0
      %243 = vmatprep.subr.bf16.mxu0 0
      %244 = vmatpush2.bf16.msra.mxu0 0
      %245 = vmatprep.subr.bf16.mxu0 0
      %246 = vmatpush2.bf16.msra.mxu0 0
      %247 = vmatprep.subr.bf16.mxu0 0
      %248 = vmatpush2.bf16.msra.mxu0 0
      %249 = vmatprep.subr.bf16.mxu0 0
      %250 = vmatpush2.bf16.msra.mxu0 0
      %251 = vmatprep.subr.bf16.mxu0 0
      %252 = vmatpush2.bf16.msra.mxu0 0
      %253 = vmatprep.subr.bf16.mxu0 0
      %254 = vmatpush2.bf16.msra.mxu0 0
      %255 = vmatprep.subr.bf16.mxu0 0
      %256 = vmatpush2.bf16.msra.mxu0 0
      %257 = vmatprep.mubr.bf16.mxu0 0
      %258 = vmatmul.mubr.bf16.gmra.mxu0 %v223
      %v259 = vpop.f32.mrf.mxu0
      %v260 = vadd.f32 0.0, %v259
      %v261 = vpop.f32.mrf.mxu0
      %v262 = vpop.f32.mrf.mxu0
      %v263 = vadd.f32 0.0, %v262
      %v264 = vpop.f32.mrf.mxu0
      %265 = vdwg.mxu0
      %v266 = vld [vmem:[#allocation3] sm:$0xff]
      %v267 = vld [vmem:[#allocation3 + $0x8] sm:$0xff]
      %269 = vset.pattern.permute.xlu0 0
      %270 = vperm.xlu0 %269, %v196
      %v271 = vpop.permute.xlu0 %270
      %274 = vset.pattern.permute.xlu0 0
      %275 = vperm.xlu0 %274, %v198
      %v276 = vpop.permute.xlu0 %275
      %v278 = vmul.f32 %v271, %v266
      %v279 = vmul.f32 %v276, %v267
      %v280 = vadd.f32 %v278, %v260
      %v281 = vadd.f32 %v279, %v263
      %vm282 = vcmask 72704
      %283 = vst.msk [vmem:[#allocation3] sm:$0xff] %vm282, %v280
      %284 = vst.msk [vmem:[#allocation3 + $0x8] sm:$0xff] %vm282, %v281
      %vm285 = vcmask 7168
      %286 = vst.msk [vmem:[#allocation2] sm:$0xff] %vm285, %v191
      %287 = vst.msk [vmem:[#allocation2 + $0x8] sm:$0xff] %vm285, %v192
      %288 = vset.pattern.permute.xlu0 1
      %289 = vperm.xlu0 %288, %v155
      %v290 = vpop.permute.xlu0 %289
      %292 = vset.pattern.permute.xlu0 1
      %293 = vperm.xlu0 %292, %v156
      %v294 = vpop.permute.xlu0 %293
      %v296 = vlaneseq
      %v297 = vshrl.u32 %v296, 7
      %v298 = vsub.s32 1, %v297
      %v299 = vrot.slane %v157, %v298
      %v300 = vadd.f32 %v290, %v299
      %v301 = vadd.f32 %v294, %v299
      %vm302 = vcmp.gt.f32.partialorder %v300, 0.0
      %vm303 = vcmp.gt.f32.partialorder %v301, 0.0
      %v304 = vmul.f32 %v300, 0.01
      %v305 = vmul.f32 %v301, 0.01
      %v306 = vsel %vm302, %v300, %v304
      %v307 = vsel %vm303, %v301, %v305
      %v308 = vadd.f32 %v306, %v151
      %v309 = vadd.f32 %v307, %v152
      %s310 = scalar_lea.vmem [#allocation2], 16
      %v311 = vld [vmem:[%s310] sm:$0xff]
      %v312 = vld [vmem:[%s310 + $0x8] sm:$0xff]
      %v313 = vsel %vm184, %v308, -inf
      %314 = vmax.xlane.f32.xlu0 %v313
      %v315 = vpop.xlane.xlu0 %314
      %v316 = vsel %vm184, %v309, -inf
      %317 = vmax.xlane.f32.xlu0 %v316
      %v318 = vpop.xlane.xlu0 %317
      %v319 = vmax.f32 %v311, %v315
      %v320 = vmax.f32 %v312, %v318
      %v321 = vsub.f32 %v311, %v319
      %v322 = vsub.f32 %v312, %v320
      %v323 = vmul.f32 %v321, 1.442695
      %v324 = vpow.pop %v323
      %v325 = vmul.f32 %v322, 1.442695
      %v326 = vpow.pop %v325
      %328 = vset.pattern.permute.xlu0 0
      %329 = vperm.xlu0 %328, %v319
      %v330 = vpop.permute.xlu0 %329
      %333 = vset.pattern.permute.xlu0 0
      %334 = vperm.xlu0 %333, %v320
      %v335 = vpop.permute.xlu0 %334
      %v337 = vsub.f32 %v308, %v330
      %v338 = vsub.f32 %v309, %v335
      %v339 = vmul.f32 %v337, 1.442695
      %v340 = vpow.pop %v339
      %v341 = vmul.f32 %v338, 1.442695
      %v342 = vpow.pop %v341
      %v343 = vpack.c.bf16 %v342, %v340
      %344 = vrot.lane.b32.xlu0 %v220, 119
      %v345 = vpop.permute.xlu0 %344
      %v348 = vsel %vm184, %v343, 0
      %350 = vmatprep.subr.bf16.mxu0 0
      %351 = vmatpush1.bf16.msra.mxu0 0
      %352 = vmatprep.subr.bf16.mxu0 0
      %353 = vmatpush1.bf16.msra.mxu0 0
      %354 = vmatprep.subr.bf16.mxu0 0
      %355 = vmatpush1.bf16.msra.mxu0 0
      %356 = vmatprep.subr.bf16.mxu0 0
      %357 = vmatpush1.bf16.msra.mxu0 0
      %358 = vmatprep.subr.bf16.mxu0 0
      %359 = vmatpush1.bf16.msra.mxu0 0
      %360 = vmatprep.subr.bf16.mxu0 0
      %361 = vmatpush1.bf16.msra.mxu0 0
      %362 = vmatprep.subr.bf16.mxu0 0
      %363 = vmatpush1.bf16.msra.mxu0 0
      %364 = vmatprep.subr.bf16.mxu0 0
      %365 = vmatpush1.bf16.msra.mxu0 %v345
      %366 = vmatprep.subr.bf16.mxu0 0
      %367 = vmatpush2.bf16.msra.mxu0 0
      %368 = vmatprep.subr.bf16.mxu0 0
      %369 = vmatpush2.bf16.msra.mxu0 0
      %370 = vmatprep.subr.bf16.mxu0 0
      %371 = vmatpush2.bf16.msra.mxu0 0
      %372 = vmatprep.subr.bf16.mxu0 0
      %373 = vmatpush2.bf16.msra.mxu0 0
      %374 = vmatprep.subr.bf16.mxu0 0
      %375 = vmatpush2.bf16.msra.mxu0 0
      %376 = vmatprep.subr.bf16.mxu0 0
      %377 = vmatpush2.bf16.msra.mxu0 0
      %378 = vmatprep.subr.bf16.mxu0 0
      %379 = vmatpush2.bf16.msra.mxu0 0
      %380 = vmatprep.subr.bf16.mxu0 0
      %381 = vmatpush2.bf16.msra.mxu0 0
      %382 = vmatprep.mubr.bf16.mxu0 0
      %383 = vmatmul.mubr.bf16.gmra.mxu0 %v348
      %v384 = vpop.f32.mrf.mxu0
      %v385 = vadd.f32 0.0, %v384
      %v386 = vpop.f32.mrf.mxu0
      %v387 = vpop.f32.mrf.mxu0
      %v388 = vadd.f32 0.0, %v387
      %v389 = vpop.f32.mrf.mxu0
      %390 = vdwg.mxu0
      %s391 = scalar_lea.vmem [#allocation3], 16
      %v392 = vld [vmem:[%s391] sm:$0xff]
      %v393 = vld [vmem:[%s391 + $0x8] sm:$0xff]
      %395 = vset.pattern.permute.xlu0 0
      %396 = vperm.xlu0 %395, %v324
      %v397 = vpop.permute.xlu0 %396
      %400 = vset.pattern.permute.xlu0 0
      %401 = vperm.xlu0 %400, %v326
      %v402 = vpop.permute.xlu0 %401
      %v404 = vmul.f32 %v397, %v392
      %v405 = vmul.f32 %v402, %v393
      %v406 = vadd.f32 %v404, %v385
      %v407 = vadd.f32 %v405, %v388
      %408 = vst.msk [vmem:[%s391] sm:$0xff] %vm282, %v406
      %409 = vst.msk [vmem:[%s391 + $0x8] sm:$0xff] %vm282, %v407
      %410 = vst.msk [vmem:[%s310] sm:$0xff] %vm285, %v319
      %411 = vst.msk [vmem:[%s310 + $0x8] sm:$0xff] %vm285, %v320
    $region25: #{gat_forward.7} parent=1 // pred_fallthru
      _
    // Predicated region
    $region26: #{gat_forward.7} parent=1 // pred_check
      %p412 = pneg %p124
    $region27: #{gat_forward.7} parent=1 // pred_check_branch
      %414 = sbr.rel (%p412) target = $region29
    $region28: #{gat_forward.7} parent=1 // pred_region
      %v415 = vld [vmem:[#allocation3] sm:$0xff]
      %v416 = vld [vmem:[#allocation3 + $0x8] sm:$0xff]
      %v417 = vmax.f32 %v415, 1e-30
      %v418 = vmax.f32 %v416, 1e-30
      %v419 = vrcp.pop %v417
      %v420 = vrcp.pop %v418
      %422 = vset.pattern.permute.xlu0 8
      %423 = vperm.xlu0 %422, %v419
      %v424 = vpop.permute.xlu0 %423
      %427 = vset.pattern.permute.xlu0 8
      %428 = vperm.xlu0 %427, %v420
      %v429 = vpop.permute.xlu0 %428
      %v431 = vmul.f32 %v415, %v424
      %v432 = vmul.f32 %v416, %v429
      %v433 = vld [vmem:[#allocation2] sm:$0xff]
      %v434 = vld [vmem:[#allocation2 + $0x8] sm:$0xff]
      %vm435 = vcmp.gt.f32.partialorder %v433, -1e+29
      %vm436 = vcmp.gt.f32.partialorder %v434, -1e+29
      %v437 = vsel %vm435, 1, 0
      %v438 = vsel %vm436, 1, 0
      %439 = vset.pattern.permute.xlu0 0
      %440 = vperm.xlu0 %439, %v437
      %v441 = vpop.permute.xlu0 %440
      %442 = vset.pattern.permute.xlu0 0
      %443 = vperm.xlu0 %442, %v438
      %v444 = vpop.permute.xlu0 %443
      %vm445 = vcmp.eq.s32.totalorder %v441, 1
      %vm446 = vcmp.eq.s32.totalorder %v444, 1
      %v447 = vsel %vm445, %v431, 0.0
      %v448 = vsel %vm446, %v432, 0.0
      %s449 = scalar_lea.vmem [#allocation3], 16
      %v450 = vld [vmem:[%s449] sm:$0xff]
      %v451 = vld [vmem:[%s449 + $0x8] sm:$0xff]
      %v452 = vmax.f32 %v450, 1e-30
      %v453 = vmax.f32 %v451, 1e-30
      %v454 = vrcp.pop %v452
      %v455 = vrcp.pop %v453
      %457 = vset.pattern.permute.xlu0 8
      %458 = vperm.xlu0 %457, %v454
      %v459 = vpop.permute.xlu0 %458
      %462 = vset.pattern.permute.xlu0 8
      %463 = vperm.xlu0 %462, %v455
      %v464 = vpop.permute.xlu0 %463
      %v466 = vmul.f32 %v450, %v459
      %v467 = vmul.f32 %v451, %v464
      %s468 = scalar_lea.vmem [#allocation2], 16
      %v469 = vld [vmem:[%s468] sm:$0xff]
      %v470 = vld [vmem:[%s468 + $0x8] sm:$0xff]
      %vm471 = vcmp.gt.f32.partialorder %v469, -1e+29
      %vm472 = vcmp.gt.f32.partialorder %v470, -1e+29
      %v473 = vsel %vm471, 1, 0
      %v474 = vsel %vm472, 1, 0
      %475 = vset.pattern.permute.xlu0 0
      %476 = vperm.xlu0 %475, %v473
      %v477 = vpop.permute.xlu0 %476
      %478 = vset.pattern.permute.xlu0 0
      %479 = vperm.xlu0 %478, %v474
      %v480 = vpop.permute.xlu0 %479
      %vm481 = vcmp.eq.s32.totalorder %v477, 1
      %vm482 = vcmp.eq.s32.totalorder %v480, 1
      %v483 = vsel %vm481, %v466, 0.0
      %v484 = vsel %vm482, %v467, 0.0
      %487 = vrot.lane.b32.xlu0 %v483, 8
      %v488 = vpop.permute.xlu0 %487
      %489 = vrot.lane.b32.xlu0 %v484, 8
      %v490 = vpop.permute.xlu0 %489
      %vm493 = vcmask 64512
      %v494 = vsel %vm493, %v447, %v488
      %v495 = vsel %vm493, %v448, %v490
      %vm496 = vcmask 130048
      %497 = vst.msk [vmem:[#allocation7] sm:$0xff] %vm496, %v494
      %498 = vst.msk [vmem:[#allocation7 + $0x8] sm:$0xff] %vm496, %v495
    $region29: #{gat_forward.7} parent=1 // pred_fallthru
      _
    // Predicated region
    $region30: #{gat_forward.7} parent=1 // pred_check
      _
    $region31: #{gat_forward.7} parent=1 // pred_check_branch
      %500 = sbr.rel (0) target = $region33
    $region32: #{gat_forward.7} parent=1 // pred_region
      %s502 = ssub.s32 256, 256
      %503 = vsyncadd [#allocation8], %s502
      %s504 = sshll.u32 [#allocation7], 4
      %s505 = int_to_ptr.vmem [resolvable:$true] %s504
      %510 = dma.vmem_to_hbm [thread:$0]  %s505, 256, %s6, [#allocation8], 128, 128, 8
    $region33: #{gat_forward.7} parent=1 // pred_fallthru
      _
    // Predicated region
    $region34: #{gat_forward.7} parent=1 // pred_check
      _
    $region35: #{gat_forward.7} parent=1 // pred_check_branch
      %512 = sbr.rel (0) target = $region37
    $region36: #{gat_forward.7} parent=1 // pred_region
      %513 = dma.done [#allocation8], 256
    $region37: #{gat_forward.7} parent=1 // pred_fallthru
      _
    %514 = vsyncpa [#allocation8], 1

</llo_original>
